<compile_context>
chip_gen: v6e
topology: v6e:2x2x1
jax: 0.10.0
libtpu: 0.0.40
codegen_flags: <defaults>
</compile_context>

<pallas_src>
import math
import jax
import jax.numpy as jnp
from jax import lax
from jax.experimental import pallas as pl
from jax.experimental.pallas import tpu as pltpu


# ----------------------------- kernel helpers ------------------------------

def _layer_norm(x, gamma, beta, eps=1e-5):
    # LayerNorm over last dim, biased variance (matches torch.nn.LayerNorm).
    mean = jnp.mean(x, axis=-1, keepdims=True)
    var = jnp.mean((x - mean) ** 2, axis=-1, keepdims=True)
    return (x - mean) * lax.rsqrt(var + eps) * gamma + beta


def _gelu(x):
    # Exact erf-based GELU (torch nn.GELU() default), f32 on the VPU/EUP.
    return 0.5 * x * (1.0 + lax.erf(x / jnp.float32(math.sqrt(2.0))))


# ------------------------------- the kernel --------------------------------

def classifier_kernel(lw_ref,                         # SMEM (L,) softmaxed layer weights
                      hs_ref,                         # VMEM (1, TB, S, H) producer dtype
                      wqkv_ref, bqkv_ref,             # fused QKV: (H, 3H) bf16 / (1, 3H) f32
                      w1_ref, b1_ref, g1_ref, be1_ref,
                      w2_ref, b2_ref, g2_ref, be2_ref,
                      w3_ref, b3_ref,
                      out_ref,                        # VMEM (TB, 128) f32
                      seq_acc,                        # scratch VMEM (TB, S, H) bf16
                      mp_acc):                        # scratch VMEM (TB, H) f32
    l = pl.program_id(1)
    n_layers = pl.num_programs(1)

    @pl.when(l == 0)
    def _():
        seq_acc[...] = jnp.zeros_like(seq_acc)
        mp_acc[...] = jnp.zeros_like(mp_acc)

    # ---- streaming phase: one fusion layer per grid step -------------------
    w_l = lw_ref[l]                                   # f32 scalar from SMEM
    hs_f32 = hs_ref[0].astype(jnp.float32)            # (TB, S, H)
    # bf16 fused-sequence accumulator (matmul operand later) ...
    seq_acc[...] += (w_l * hs_f32).astype(jnp.bfloat16)
    # ... and exact f32 mean-pooled accumulator (S-reduce is free filler
    # under the DMA stalls of the mem-bound streaming loop).
    mp_acc[...] += w_l * jnp.mean(hs_f32, axis=1)     # (TB, H)

    # ---- epilogue: attention + classifier MLP on the last layer step -------
    @pl.when(l == n_layers - 1)
    def _():
        seq_bf = seq_acc[...]                         # (TB, S, H) bf16
        TB, S, H = seq_bf.shape

        # Fused Q/K/V projection as one 2-D MXU matmul on (TB*S, H) rows.
        # (1/sqrt(H) is already folded into the Q columns of wqkv/bqkv.)
        x2d = seq_bf.reshape(TB * S, H)
        qkv = jnp.dot(x2d, wqkv_ref[...],
                      preferred_element_type=jnp.float32) + bqkv_ref[...]
        q = qkv[:, 0:H].reshape(TB, S, H)
        k = qkv[:, H:2 * H].reshape(TB, S, H)
        v = qkv[:, 2 * H:3 * H].reshape(TB, S, H)

        # Scaled dot-product attention scores + softmax over keys.
        s = jnp.einsum('bqd,bkd->bqk',
                       q.astype(jnp.bfloat16), k.astype(jnp.bfloat16),
                       preferred_element_type=jnp.float32)
        s = s - jnp.max(s, axis=-1, keepdims=True)
        e = jnp.exp(s)
        probs = e * pl.reciprocal(jnp.sum(e, axis=-1, keepdims=True),
                                  approx=True)        # softmax(dim=-1)

        # mean_q(probs @ V) == (mean_q probs) contracted with V:
        # pooled probs drop the second attention matmul to O(TB*S*H).
        pbar = jnp.mean(probs, axis=1)                # (TB, S) f32
        ctx_mean = jnp.sum(pbar[:, :, None] * v, axis=1)   # (TB, H) f32

        combined = ctx_mean + mp_acc[...]             # (TB, H)

        # Classifier MLP (Dropout == identity in eval mode).
        h1 = jnp.dot(combined.astype(jnp.bfloat16), w1_ref[...],
                     preferred_element_type=jnp.float32) + b1_ref[...]
        h1 = _gelu(_layer_norm(h1, g1_ref[...], be1_ref[...]))
        h2 = jnp.dot(h1.astype(jnp.bfloat16), w2_ref[...],
                     preferred_element_type=jnp.float32) + b2_ref[...]
        h2 = _gelu(_layer_norm(h2, g2_ref[...], be2_ref[...]))
        logits = jnp.dot(h2.astype(jnp.bfloat16), w3_ref[...],
                         preferred_element_type=jnp.float32) + b3_ref[...]
        out_ref[...] = logits.astype(out_ref.dtype)   # (TB, 128) lane-dense


# ------------------------------- wrapper ------------------------------------

def qwen_classifier_head(hidden_states, params, *, batch_tile=None, out_lanes=128):
    """hidden_states: (L, B, S, H). Returns logits (B, num_labels) f32.

    batch_tile: rows per grid step (multiple of 8). Default auto-selects
                min(128, round_up(B, 8)); raise towards 128 in production so
                the MLP matmuls fill the MXU rows (and keep ceil(B/TB) >= 2 on
                v7x so both TensorCores get work).
    """
    L, B, S, H = hidden_states.shape
    num_labels = params['w3'].shape[1]

    if batch_tile is None:
        batch_tile = min(128, 8 * ((B + 7) // 8))
    TB = batch_tile
    assert TB % 8 == 0
    nb = -(-B // TB)
    B_pad = nb * TB

    NL = out_lanes                                    # lane-dense logits width
    assert NL % 128 == 0 and NL >= num_labels

    # Stream hidden states in the producer dtype (no extra cast pass over the
    # dominant HBM stream); zero-pad batch only if needed.
    hs = hidden_states
    if B_pad != B:
        hs = jnp.pad(hs, ((0, 0), (0, B_pad - B), (0, 0), (0, 0)))

    # Layer-weight softmax is tiny -> wrapper; scalars go to SMEM.
    lw = jax.nn.softmax(params['layer_w'].reshape(-1).astype(jnp.float32))

    # Fuse Q/K/V into one (H, 3H) weight; fold the 1/sqrt(H) attention scale
    # into the Q columns (exact: (xWq+bq)/sqrt(H)).
    inv_sqrt_h = jnp.float32(1.0 / math.sqrt(H))
    wqkv = jnp.concatenate(
        [params['wq'] * inv_sqrt_h, params['wk'], params['wv']], axis=1)
    bqkv = jnp.concatenate(
        [params['bq'] * inv_sqrt_h, params['bk'], params['bv']], axis=1)

    # Pad the final projection to 128 output lanes (dense vst epilogue).
    w3 = jnp.pad(params['w3'], ((0, 0), (0, NL - num_labels)))
    b3 = jnp.pad(params['b3'], ((0, 0), (0, NL - num_labels)))

    bf = lambda x: x.astype(jnp.bfloat16)             # matmul weights -> bf16
    inputs = [
        lw, hs,
        bf(wqkv), bqkv.astype(jnp.float32),
        bf(params['w1']), params['b1'], params['g1'], params['be1'],
        bf(params['w2']), params['b2'], params['g2'], params['be2'],
        bf(w3), b3,
    ]

    def rep_spec(x):                                  # weights: resident, never re-DMA'd
        nd = x.ndim
        return pl.BlockSpec(x.shape, lambda b, l, _nd=nd: (0,) * _nd)

    in_specs = [
        pl.BlockSpec(memory_space=pltpu.MemorySpace.SMEM),          # layer weights
        pl.BlockSpec((1, TB, S, H), lambda b, l: (l, b, 0, 0)),     # stream layer l, batch tile b
    ] + [rep_spec(x) for x in inputs[2:]]

    # Rough VMEM footprint; raise the scoped limit only when the default
    # (16/32 MiB) would be exceeded.
    hs_item = jnp.dtype(hs.dtype).itemsize
    weights_bytes = sum(int(x.size) * jnp.dtype(x.dtype).itemsize
                        for x in inputs[2:])
    est = (2 * TB * S * H * hs_item        # double-buffered hs stream
           + TB * S * H * 2                # bf16 seq_acc scratch
           + TB * H * 4                    # f32 mp_acc scratch
           + 2 * weights_bytes             # resident weights (worst-case 2x buffered)
           + 2 * TB * NL * 4               # output block
           + 4 * TB * S * max(S, 3 * H) * 4)   # epilogue temps (qkv / scores / probs)
    vmem_limit = None
    if est > 32 * 1024 * 1024:
        # TODO(synk): cap nearer ~48 MiB when targeting v7x (64 MiB physical).
        vmem_limit = min(int(est), 100 * 1024 * 1024)

    out = pl.pallas_call(
        classifier_kernel,
        out_shape=jax.ShapeDtypeStruct((B_pad, NL), jnp.float32),
        grid_spec=pltpu.PrefetchScalarGridSpec(
            num_scalar_prefetch=0,
            grid=(nb, L),                              # (batch tiles, fusion layers)
            in_specs=in_specs,
            out_specs=pl.BlockSpec((TB, NL), lambda b, l: (b, 0)),
            scratch_shapes=[pltpu.VMEM((TB, S, H), jnp.bfloat16),
                            pltpu.VMEM((TB, H), jnp.float32)],
        ),
        compiler_params=pltpu.CompilerParams(
            dimension_semantics=("parallel", "arbitrary"),
            vmem_limit_bytes=vmem_limit),
    )(*inputs)

    return out[:B, :num_labels]


# ----------------------- pure-JAX reference (for check) ---------------------

def reference_head(hs, p):
    lw = jax.nn.softmax(p['layer_w'], axis=-1)[0]
    seq_out = jnp.einsum('l,lbsh->bsh', lw, hs)
    q = jnp.einsum('bsh,hd->bsd', seq_out, p['wq']) + p['bq']
    k = jnp.einsum('bsh,hd->bsd', seq_out, p['wk']) + p['bk']
    v = jnp.einsum('bsh,hd->bsd', seq_out, p['wv']) + p['bv']
    scores = jnp.einsum('bqd,bkd->bqk', q, k) / (q.shape[-1] ** 0.5)
    probs = jax.nn.softmax(scores, axis=-1)
    ctx_mean = jnp.einsum('bqk,bkd->bqd', probs, v).mean(axis=1)
    combined = ctx_mean + seq_out.mean(axis=1)

    def ln(x, g, b):
        m = x.mean(-1, keepdims=True)
        var = ((x - m) ** 2).mean(-1, keepdims=True)
        return (x - m) * lax.rsqrt(var + 1e-5) * g + b

    def gelu(x):
        return 0.5 * x * (1.0 + lax.erf(x / jnp.float32(math.sqrt(2.0))))

    h1 = gelu(ln(combined @ p['w1'] + p['b1'], p['g1'], p['be1']))
    h2 = gelu(ln(h1 @ p['w2'] + p['b2'], p['g2'], p['be2']))
    return h2 @ p['w3'] + p['b3']


# --------------------------------- main --------------------------------------

if __name__ == "__main__":
    # Small shapes consistent with the module's forward.
    L = 4          # num_fusion_layers
    B = 2          # batch
    S = 8          # sequence length
    H = 32         # hidden_size
    NUM_LABELS = 5
    VOCAB = 64

    key = jax.random.PRNGKey(0)
    keys = jax.random.split(key, 20)

    # --- synthetic frozen "base model": input_ids -> L hidden-state layers ---
    input_ids = jax.random.randint(keys[0], (B, S), 0, VOCAB)
    emb_table = 0.1 * jax.random.normal(keys[1], (VOCAB, H), jnp.float32)
    emb = emb_table[input_ids]                              # (B, S, H)
    layer_mix = 0.2 * jax.random.normal(keys[2], (L, H, H), jnp.float32)
    hidden_states = jnp.tanh(jnp.einsum('bsh,lhd->lbsd', emb, layer_mix))

    # --- deterministic classifier parameters (shapes from __init__) ----------
    def lin(k, fan_in, fan_out, scale=0.05):
        kw, kb = jax.random.split(k)
        w = scale * jax.random.normal(kw, (fan_in, fan_out), jnp.float32)
        b = scale * jax.random.normal(kb, (1, fan_out), jnp.float32)
        return w, b

    wq, bq = lin(keys[3], H, H)
    wk, bk = lin(keys[4], H, H)
    wv, bv = lin(keys[5], H, H)
    w1, b1 = lin(keys[6], H, 256)
    w2, b2 = lin(keys[7], 256, 128)
    w3, b3 = lin(keys[8], 128, NUM_LABELS)

    params = dict(
        layer_w=jnp.full((1, L), 1.0 / L, jnp.float32),   # nn.Parameter(ones/L)
        wq=wq, bq=bq, wk=wk, bk=bk, wv=wv, bv=bv,
        w1=w1, b1=b1,
        g1=jnp.ones((1, 256), jnp.float32), be1=jnp.zeros((1, 256), jnp.float32),
        w2=w2, b2=b2,
        g2=jnp.ones((1, 128), jnp.float32), be2=jnp.zeros((1, 128), jnp.float32),
        w3=w3, b3=b3,
    )

    logits = qwen_classifier_head(hidden_states, params)
    logits = jax.block_until_ready(logits)

    # Optional loss path (plain-JAX glue), matching CrossEntropyLoss.
    labels = jax.random.randint(keys[9], (B,), 0, NUM_LABELS)
    logz = jax.scipy.special.logsumexp(logits, axis=-1)
    loss = jnp.mean(logz - logits[jnp.arange(B), labels])
    loss = jax.block_until_ready(loss)

    ref = reference_head(hidden_states, params)
    assert logits.shape == (B, NUM_LABELS)
    # bf16 MXU inputs / bf16 fused-seq accumulator + approx reciprocal =>
    # looser tolerance vs the f32 reference.
    assert bool(jnp.allclose(logits, ref, rtol=5e-2, atol=5e-2)), (
        "mismatch vs reference: max abs diff = "
        f"{float(jnp.max(jnp.abs(logits - ref)))}")
    print("KERNEL_OK")
</pallas_src>

<mosaic_0001>
module attributes {stable_mosaic.version = 11 : i64} {
  func.func @classifier_kernel(%arg0: i32, %arg1: i32, %arg2: memref<4xf32, #tpu.memory_space<smem>>, %arg3: memref<1x8x8x32xf32, #tpu.memory_space<vmem>>, %arg4: memref<32x96xbf16, #tpu.memory_space<vmem>>, %arg5: memref<1x96xf32, #tpu.memory_space<vmem>>, %arg6: memref<32x256xbf16, #tpu.memory_space<vmem>>, %arg7: memref<1x256xf32, #tpu.memory_space<vmem>>, %arg8: memref<1x256xf32, #tpu.memory_space<vmem>>, %arg9: memref<1x256xf32, #tpu.memory_space<vmem>>, %arg10: memref<256x128xbf16, #tpu.memory_space<vmem>>, %arg11: memref<1x128xf32, #tpu.memory_space<vmem>>, %arg12: memref<1x128xf32, #tpu.memory_space<vmem>>, %arg13: memref<1x128xf32, #tpu.memory_space<vmem>>, %arg14: memref<128x128xbf16, #tpu.memory_space<vmem>>, %arg15: memref<1x128xf32, #tpu.memory_space<vmem>>, %arg16: memref<8x128xf32, #tpu.memory_space<vmem>>, %arg17: memref<8x8x32xbf16, #tpu.memory_space<vmem>>, %arg18: memref<8x32xf32, #tpu.memory_space<vmem>>) attributes {dimension_semantics = [#tpu.dimension_semantics<parallel>, #tpu.dimension_semantics<arbitrary>], iteration_bounds = array<i64: 1, 4>, scalar_prefetch = 0 : i64, scratch_operands = 2 : i64, tpu.core_type = #tpu.core_type<tc>, window_params = [{transform_indices = @transform_0, window_bounds = array<i64: 4>}, {transform_indices = @transform_1, window_bounds = array<i64: 1, 8, 8, 32>}, {pipeline_mode = #tpu.pipeline_mode<synchronous>, transform_indices = @transform_2, window_bounds = array<i64: 32, 96>}, {pipeline_mode = #tpu.pipeline_mode<synchronous>, transform_indices = @transform_3, window_bounds = array<i64: 1, 96>}, {pipeline_mode = #tpu.pipeline_mode<synchronous>, transform_indices = @transform_4, window_bounds = array<i64: 32, 256>}, {pipeline_mode = #tpu.pipeline_mode<synchronous>, transform_indices = @transform_5, window_bounds = array<i64: 1, 256>}, {pipeline_mode = #tpu.pipeline_mode<synchronous>, transform_indices = @transform_6, window_bounds = array<i64: 1, 256>}, {pipeline_mode = #tpu.pipeline_mode<synchronous>, transform_indices = @transform_7, window_bounds = array<i64: 1, 256>}, {pipeline_mode = #tpu.pipeline_mode<synchronous>, transform_indices = @transform_8, window_bounds = array<i64: 256, 128>}, {pipeline_mode = #tpu.pipeline_mode<synchronous>, transform_indices = @transform_9, window_bounds = array<i64: 1, 128>}, {pipeline_mode = #tpu.pipeline_mode<synchronous>, transform_indices = @transform_10, window_bounds = array<i64: 1, 128>}, {pipeline_mode = #tpu.pipeline_mode<synchronous>, transform_indices = @transform_11, window_bounds = array<i64: 1, 128>}, {pipeline_mode = #tpu.pipeline_mode<synchronous>, transform_indices = @transform_12, window_bounds = array<i64: 128, 128>}, {pipeline_mode = #tpu.pipeline_mode<synchronous>, transform_indices = @transform_13, window_bounds = array<i64: 1, 128>}, {transform_indices = @transform_14, window_bounds = array<i64: 8, 128>}]} {
    %c0_i32 = arith.constant 0 : i32
    %0 = arith.cmpi eq, %arg1, %c0_i32 : i32
    %1 = arith.extui %0 : i1 to i32
    %c0_i32_0 = arith.constant 0 : i32
    %2 = arith.cmpi ne, %1, %c0_i32_0 : i32
    scf.if %2 {
      %cst_16 = arith.constant 0.000000e+00 : bf16
      %24 = vector.broadcast %cst_16 : bf16 to vector<8x8x32xbf16>
      %c0_17 = arith.constant 0 : index
      %c0_18 = arith.constant 0 : index
      %c0_19 = arith.constant 0 : index
      %25 = vector.load %arg17[%c0_17, %c0_18, %c0_19] : memref<8x8x32xbf16, #tpu.memory_space<vmem>>, vector<8x8x32xbf16>
      tpu.vector_store %arg17[%c0_17, %c0_18, %c0_19], %24 {strides = array<i32>} : memref<8x8x32xbf16, #tpu.memory_space<vmem>>, vector<8x8x32xbf16>,
      %cst_20 = arith.constant 0.000000e+00 : f32
      %26 = vector.broadcast %cst_20 : f32 to vector<8x32xf32>
      %c0_21 = arith.constant 0 : index
      %c0_22 = arith.constant 0 : index
      %27 = vector.load %arg18[%c0_21, %c0_22] : memref<8x32xf32, #tpu.memory_space<vmem>>, vector<8x32xf32>
      tpu.vector_store %arg18[%c0_21, %c0_22], %26 {strides = array<i32>} : memref<8x32xf32, #tpu.memory_space<vmem>>, vector<8x32xf32>,
    } else {
    }
    %3 = arith.index_cast %arg1 : i32 to index
    %4 = memref.load %arg2[%3] : memref<4xf32, #tpu.memory_space<smem>>
    %c0 = arith.constant 0 : index
    %c0_1 = arith.constant 0 : index
    %c0_2 = arith.constant 0 : index
    %c0_3 = arith.constant 0 : index
    %5 = vector.load %arg3[%c0, %c0_1, %c0_2, %c0_3] : memref<1x8x8x32xf32, #tpu.memory_space<vmem>>, vector<1x8x8x32xf32>
    %6 = vector.shape_cast %5 : vector<1x8x8x32xf32> to vector<8x8x32xf32>
    %c0_4 = arith.constant 0 : index
    %c0_5 = arith.constant 0 : index
    %c0_6 = arith.constant 0 : index
    %7 = vector.load %arg17[%c0_4, %c0_5, %c0_6] : memref<8x8x32xbf16, #tpu.memory_space<vmem>>, vector<8x8x32xbf16>
    %8 = vector.broadcast %4 : f32 to vector<8x8x32xf32>
    %9 = arith.mulf %8, %6 : vector<8x8x32xf32>
    %10 = arith.truncf %9 : vector<8x8x32xf32> to vector<8x8x32xbf16>
    %11 = arith.addf %7, %10 : vector<8x8x32xbf16>
    %c0_7 = arith.constant 0 : index
    %c0_8 = arith.constant 0 : index
    %c0_9 = arith.constant 0 : index
    %12 = vector.load %arg17[%c0_7, %c0_8, %c0_9] : memref<8x8x32xbf16, #tpu.memory_space<vmem>>, vector<8x8x32xbf16>
    tpu.vector_store %arg17[%c0_7, %c0_8, %c0_9], %11 {strides = array<i32>} : memref<8x8x32xbf16, #tpu.memory_space<vmem>>, vector<8x8x32xbf16>,
    %c0_10 = arith.constant 0 : index
    %c0_11 = arith.constant 0 : index
    %13 = vector.load %arg18[%c0_10, %c0_11] : memref<8x32xf32, #tpu.memory_space<vmem>>, vector<8x32xf32>
    %cst = arith.constant dense<0.000000e+00> : vector<8x32xf32>
    %14 = vector.multi_reduction <add>, %6, %cst [1] : vector<8x8x32xf32> to vector<8x32xf32>
    %cst_12 = arith.constant 8.000000e+00 : f32
    %15 = vector.broadcast %cst_12 : f32 to vector<8x32xf32>
    %16 = arith.divf %14, %15 : vector<8x32xf32>
    %17 = vector.broadcast %4 : f32 to vector<8x32xf32>
    %18 = arith.mulf %17, %16 : vector<8x32xf32>
    %19 = arith.addf %13, %18 : vector<8x32xf32>
    %c0_13 = arith.constant 0 : index
    %c0_14 = arith.constant 0 : index
    %20 = vector.load %arg18[%c0_13, %c0_14] : memref<8x32xf32, #tpu.memory_space<vmem>>, vector<8x32xf32>
    tpu.vector_store %arg18[%c0_13, %c0_14], %19 {strides = array<i32>} : memref<8x32xf32, #tpu.memory_space<vmem>>, vector<8x32xf32>,
    %c3_i32 = arith.constant 3 : i32
    %21 = arith.cmpi eq, %arg1, %c3_i32 : i32
    %22 = arith.extui %21 : i1 to i32
    %c0_i32_15 = arith.constant 0 : i32
    %23 = arith.cmpi ne, %22, %c0_i32_15 : i32
    scf.if %23 {
      %c0_16 = arith.constant 0 : index
      %c0_17 = arith.constant 0 : index
      %c0_18 = arith.constant 0 : index
      %24 = vector.load %arg17[%c0_16, %c0_17, %c0_18] : memref<8x8x32xbf16, #tpu.memory_space<vmem>>, vector<8x8x32xbf16>
      %25 = vector.shape_cast %24 : vector<8x8x32xbf16> to vector<64x32xbf16>
      %c0_19 = arith.constant 0 : index
      %c0_20 = arith.constant 0 : index
      %26 = vector.load %arg4[%c0_19, %c0_20] : memref<32x96xbf16, #tpu.memory_space<vmem>>, vector<32x96xbf16>
      %cst_21 = arith.constant dense<0.000000e+00> : vector<64x96xf32>
      %27 = tpu.matmul %25, %26, %cst_21 {dimension_numbers = #tpu.dot_dimension_numbers<[1], [0], [0], [1], [0, 0, 1, 1], [], []>} : vector<64x32xbf16>, vector<32x96xbf16>, vector<64x96xf32> -> vector<64x96xf32>
      %c0_22 = arith.constant 0 : index
      %c0_23 = arith.constant 0 : index
      %28 = vector.load %arg5[%c0_22, %c0_23] : memref<1x96xf32, #tpu.memory_space<vmem>>, vector<1x96xf32>
      %29 = vector.broadcast %28 : vector<1x96xf32> to vector<64x96xf32>
      %30 = arith.addf %27, %29 : vector<64x96xf32>
      %31 = vector.extract_strided_slice %30 {offsets = [0, 0], sizes = [64, 32], strides = [1, 1]} : vector<64x96xf32> to vector<64x32xf32>
      %32 = vector.shape_cast %31 : vector<64x32xf32> to vector<8x8x32xf32>
      %33 = vector.extract_strided_slice %30 {offsets = [0, 32], sizes = [64, 32], strides = [1, 1]} : vector<64x96xf32> to vector<64x32xf32>
      %34 = vector.shape_cast %33 : vector<64x32xf32> to vector<8x8x32xf32>
      %35 = vector.extract_strided_slice %30 {offsets = [0, 64], sizes = [64, 32], strides = [1, 1]} : vector<64x96xf32> to vector<64x32xf32>
      %36 = vector.shape_cast %35 : vector<64x32xf32> to vector<8x8x32xf32>
      %37 = arith.truncf %32 : vector<8x8x32xf32> to vector<8x8x32xbf16>
      %38 = arith.truncf %34 : vector<8x8x32xf32> to vector<8x8x32xbf16>
      "tpu.trace_start"() <{level = 10 : i32, message = "bqd,bkd->bqk"}> : () -> ()
      %cst_24 = arith.constant dense<0.000000e+00> : vector<8x8x8xf32>
      %39 = tpu.matmul %37, %38, %cst_24 {dimension_numbers = #tpu.dot_dimension_numbers<[2], [2], [1], [1], [0, 0, 0, 1, 1, 1], [0], [0]>} : vector<8x8x32xbf16>, vector<8x8x32xbf16>, vector<8x8x8xf32> -> vector<8x8x8xf32>
      "tpu.trace_stop"() : () -> ()
      %cst_25 = arith.constant dense<0xFF800000> : vector<8x8xf32>
      %40 = vector.multi_reduction <maximumf>, %39, %cst_25 [2] : vector<8x8x8xf32> to vector<8x8xf32>
      %41 = vector.shape_cast %40 : vector<8x8xf32> to vector<8x8x1xf32>
      %42 = vector.broadcast %41 : vector<8x8x1xf32> to vector<8x8x8xf32>
      %43 = arith.subf %39, %42 : vector<8x8x8xf32>
      %44 = math.exp %43 : vector<8x8x8xf32>
      %cst_26 = arith.constant dense<0.000000e+00> : vector<8x8xf32>
      %45 = vector.multi_reduction <add>, %44, %cst_26 [2] : vector<8x8x8xf32> to vector<8x8xf32>
      %46 = vector.shape_cast %45 : vector<8x8xf32> to vector<8x8x1xf32>
      %47 = tpu.reciprocal %46 {approx = true} : vector<8x8x1xf32> -> vector<8x8x1xf32>
      %48 = vector.broadcast %47 : vector<8x8x1xf32> to vector<8x8x8xf32>
      %49 = arith.mulf %44, %48 : vector<8x8x8xf32>
      %cst_27 = arith.constant dense<0.000000e+00> : vector<8x8xf32>
      %50 = vector.multi_reduction <add>, %49, %cst_27 [1] : vector<8x8x8xf32> to vector<8x8xf32>
      %cst_28 = arith.constant 8.000000e+00 : f32
      %51 = vector.broadcast %cst_28 : f32 to vector<8x8xf32>
      %52 = arith.divf %50, %51 : vector<8x8xf32>
      %53 = vector.shape_cast %52 : vector<8x8xf32> to vector<8x8x1xf32>
      %54 = vector.broadcast %53 : vector<8x8x1xf32> to vector<8x8x32xf32>
      %55 = arith.mulf %54, %36 : vector<8x8x32xf32>
      %cst_29 = arith.constant dense<0.000000e+00> : vector<8x32xf32>
      %56 = vector.multi_reduction <add>, %55, %cst_29 [1] : vector<8x8x32xf32> to vector<8x32xf32>
      %c0_30 = arith.constant 0 : index
      %c0_31 = arith.constant 0 : index
      %57 = vector.load %arg18[%c0_30, %c0_31] : memref<8x32xf32, #tpu.memory_space<vmem>>, vector<8x32xf32>
      %58 = arith.addf %56, %57 : vector<8x32xf32>
      %59 = arith.truncf %58 : vector<8x32xf32> to vector<8x32xbf16>
      %c0_32 = arith.constant 0 : index
      %c0_33 = arith.constant 0 : index
      %60 = vector.load %arg6[%c0_32, %c0_33] : memref<32x256xbf16, #tpu.memory_space<vmem>>, vector<32x256xbf16>
      %cst_34 = arith.constant dense<0.000000e+00> : vector<8x256xf32>
      %61 = tpu.matmul %59, %60, %cst_34 {dimension_numbers = #tpu.dot_dimension_numbers<[1], [0], [0], [1], [0, 0, 1, 1], [], []>} : vector<8x32xbf16>, vector<32x256xbf16>, vector<8x256xf32> -> vector<8x256xf32>
      %c0_35 = arith.constant 0 : index
      %c0_36 = arith.constant 0 : index
      %62 = vector.load %arg7[%c0_35, %c0_36] : memref<1x256xf32, #tpu.memory_space<vmem>>, vector<1x256xf32>
      %63 = vector.broadcast %62 : vector<1x256xf32> to vector<8x256xf32>
      %64 = arith.addf %61, %63 : vector<8x256xf32>
      %c0_37 = arith.constant 0 : index
      %c0_38 = arith.constant 0 : index
      %65 = vector.load %arg8[%c0_37, %c0_38] : memref<1x256xf32, #tpu.memory_space<vmem>>, vector<1x256xf32>
      %c0_39 = arith.constant 0 : index
      %c0_40 = arith.constant 0 : index
      %66 = vector.load %arg9[%c0_39, %c0_40] : memref<1x256xf32, #tpu.memory_space<vmem>>, vector<1x256xf32>
      %cst_41 = arith.constant dense<0.000000e+00> : vector<8xf32>
      %67 = vector.multi_reduction <add>, %64, %cst_41 [1] : vector<8x256xf32> to vector<8xf32>
      %68 = vector.shape_cast %67 : vector<8xf32> to vector<8x1xf32>
      %cst_42 = arith.constant 2.560000e+02 : f32
      %69 = vector.broadcast %cst_42 : f32 to vector<8x1xf32>
      %70 = arith.divf %68, %69 : vector<8x1xf32>
      %71 = vector.broadcast %70 : vector<8x1xf32> to vector<8x256xf32>
      %72 = arith.subf %64, %71 : vector<8x256xf32>
      %73 = arith.mulf %72, %72 : vector<8x256xf32>
      %cst_43 = arith.constant dense<0.000000e+00> : vector<8xf32>
      %74 = vector.multi_reduction <add>, %73, %cst_43 [1] : vector<8x256xf32> to vector<8xf32>
      %75 = vector.shape_cast %74 : vector<8xf32> to vector<8x1xf32>
      %cst_44 = arith.constant 2.560000e+02 : f32
      %76 = vector.broadcast %cst_44 : f32 to vector<8x1xf32>
      %77 = arith.divf %75, %76 : vector<8x1xf32>
      %78 = vector.broadcast %70 : vector<8x1xf32> to vector<8x256xf32>
      %79 = arith.subf %64, %78 : vector<8x256xf32>
      %cst_45 = arith.constant 9.99999974E-6 : f32
      %80 = vector.broadcast %cst_45 : f32 to vector<8x1xf32>
      %81 = arith.addf %77, %80 : vector<8x1xf32>
      %82 = math.rsqrt %81 : vector<8x1xf32>
      %83 = vector.broadcast %82 : vector<8x1xf32> to vector<8x256xf32>
      %84 = arith.mulf %79, %83 : vector<8x256xf32>
      %85 = vector.broadcast %65 : vector<1x256xf32> to vector<8x256xf32>
      %86 = arith.mulf %84, %85 : vector<8x256xf32>
      %87 = vector.broadcast %66 : vector<1x256xf32> to vector<8x256xf32>
      %88 = arith.addf %86, %87 : vector<8x256xf32>
      %cst_46 = arith.constant 5.000000e-01 : f32
      %89 = vector.broadcast %cst_46 : f32 to vector<8x256xf32>
      %90 = arith.mulf %89, %88 : vector<8x256xf32>
      %cst_47 = arith.constant 1.41421354 : f32
      %91 = vector.broadcast %cst_47 : f32 to vector<8x256xf32>
      %92 = arith.divf %88, %91 : vector<8x256xf32>
      %93 = math.erf %92 : vector<8x256xf32>
      %cst_48 = arith.constant 1.000000e+00 : f32
      %94 = vector.broadcast %cst_48 : f32 to vector<8x256xf32>
      %95 = arith.addf %94, %93 : vector<8x256xf32>
      %96 = arith.mulf %90, %95 : vector<8x256xf32>
      %97 = arith.truncf %96 : vector<8x256xf32> to vector<8x256xbf16>
      %c0_49 = arith.constant 0 : index
      %c0_50 = arith.constant 0 : index
      %98 = vector.load %arg10[%c0_49, %c0_50] : memref<256x128xbf16, #tpu.memory_space<vmem>>, vector<256x128xbf16>
      %cst_51 = arith.constant dense<0.000000e+00> : vector<8x128xf32>
      %99 = tpu.matmul %97, %98, %cst_51 {dimension_numbers = #tpu.dot_dimension_numbers<[1], [0], [0], [1], [0, 0, 1, 1], [], []>} : vector<8x256xbf16>, vector<256x128xbf16>, vector<8x128xf32> -> vector<8x128xf32>
      %c0_52 = arith.constant 0 : index
      %c0_53 = arith.constant 0 : index
      %100 = vector.load %arg11[%c0_52, %c0_53] : memref<1x128xf32, #tpu.memory_space<vmem>>, vector<1x128xf32>
      %101 = vector.broadcast %100 : vector<1x128xf32> to vector<8x128xf32>
      %102 = arith.addf %99, %101 : vector<8x128xf32>
      %c0_54 = arith.constant 0 : index
      %c0_55 = arith.constant 0 : index
      %103 = vector.load %arg12[%c0_54, %c0_55] : memref<1x128xf32, #tpu.memory_space<vmem>>, vector<1x128xf32>
      %c0_56 = arith.constant 0 : index
      %c0_57 = arith.constant 0 : index
      %104 = vector.load %arg13[%c0_56, %c0_57] : memref<1x128xf32, #tpu.memory_space<vmem>>, vector<1x128xf32>
      %cst_58 = arith.constant dense<0.000000e+00> : vector<8xf32>
      %105 = vector.multi_reduction <add>, %102, %cst_58 [1] : vector<8x128xf32> to vector<8xf32>
      %106 = vector.shape_cast %105 : vector<8xf32> to vector<8x1xf32>
      %cst_59 = arith.constant 1.280000e+02 : f32
      %107 = vector.broadcast %cst_59 : f32 to vector<8x1xf32>
      %108 = arith.divf %106, %107 : vector<8x1xf32>
      %109 = vector.broadcast %108 : vector<8x1xf32> to vector<8x128xf32>
      %110 = arith.subf %102, %109 : vector<8x128xf32>
      %111 = arith.mulf %110, %110 : vector<8x128xf32>
      %cst_60 = arith.constant dense<0.000000e+00> : vector<8xf32>
      %112 = vector.multi_reduction <add>, %111, %cst_60 [1] : vector<8x128xf32> to vector<8xf32>
      %113 = vector.shape_cast %112 : vector<8xf32> to vector<8x1xf32>
      %cst_61 = arith.constant 1.280000e+02 : f32
      %114 = vector.broadcast %cst_61 : f32 to vector<8x1xf32>
      %115 = arith.divf %113, %114 : vector<8x1xf32>
      %116 = vector.broadcast %108 : vector<8x1xf32> to vector<8x128xf32>
      %117 = arith.subf %102, %116 : vector<8x128xf32>
      %cst_62 = arith.constant 9.99999974E-6 : f32
      %118 = vector.broadcast %cst_62 : f32 to vector<8x1xf32>
      %119 = arith.addf %115, %118 : vector<8x1xf32>
      %120 = math.rsqrt %119 : vector<8x1xf32>
      %121 = vector.broadcast %120 : vector<8x1xf32> to vector<8x128xf32>
      %122 = arith.mulf %117, %121 : vector<8x128xf32>
      %123 = vector.broadcast %103 : vector<1x128xf32> to vector<8x128xf32>
      %124 = arith.mulf %122, %123 : vector<8x128xf32>
      %125 = vector.broadcast %104 : vector<1x128xf32> to vector<8x128xf32>
      %126 = arith.addf %124, %125 : vector<8x128xf32>
      %cst_63 = arith.constant 5.000000e-01 : f32
      %127 = vector.broadcast %cst_63 : f32 to vector<8x128xf32>
      %128 = arith.mulf %127, %126 : vector<8x128xf32>
      %cst_64 = arith.constant 1.41421354 : f32
      %129 = vector.broadcast %cst_64 : f32 to vector<8x128xf32>
      %130 = arith.divf %126, %129 : vector<8x128xf32>
      %131 = math.erf %130 : vector<8x128xf32>
      %cst_65 = arith.constant 1.000000e+00 : f32
      %132 = vector.broadcast %cst_65 : f32 to vector<8x128xf32>
      %133 = arith.addf %132, %131 : vector<8x128xf32>
      %134 = arith.mulf %128, %133 : vector<8x128xf32>
      %135 = arith.truncf %134 : vector<8x128xf32> to vector<8x128xbf16>
      %c0_66 = arith.constant 0 : index
      %c0_67 = arith.constant 0 : index
      %136 = vector.load %arg14[%c0_66, %c0_67] : memref<128x128xbf16, #tpu.memory_space<vmem>>, vector<128x128xbf16>
      %cst_68 = arith.constant dense<0.000000e+00> : vector<8x128xf32>
      %137 = tpu.matmul %135, %136, %cst_68 {dimension_numbers = #tpu.dot_dimension_numbers<[1], [0], [0], [1], [0, 0, 1, 1], [], []>} : vector<8x128xbf16>, vector<128x128xbf16>, vector<8x128xf32> -> vector<8x128xf32>
      %c0_69 = arith.constant 0 : index
      %c0_70 = arith.constant 0 : index
      %138 = vector.load %arg15[%c0_69, %c0_70] : memref<1x128xf32, #tpu.memory_space<vmem>>, vector<1x128xf32>
      %139 = vector.broadcast %138 : vector<1x128xf32> to vector<8x128xf32>
      %140 = arith.addf %137, %139 : vector<8x128xf32>
      %c0_71 = arith.constant 0 : index
      %c0_72 = arith.constant 0 : index
      %141 = vector.load %arg16[%c0_71, %c0_72] : memref<8x128xf32, #tpu.memory_space<vmem>>, vector<8x128xf32>
      tpu.vector_store %arg16[%c0_71, %c0_72], %140 {strides = array<i32>} : memref<8x128xf32, #tpu.memory_space<vmem>>, vector<8x128xf32>,
    } else {
    }
    return
  }
  func.func @transform_0(%arg0: i32, %arg1: i32) -> i32 {
    %c0_i32 = arith.constant 0 : i32
    %c0_i32_0 = arith.constant 0 : i32
    return %c0_i32 : i32
  }
  func.func @transform_1(%arg0: i32, %arg1: i32) -> (i32, i32, i32, i32) {
    %c0_i32 = arith.constant 0 : i32
    %c0_i32_0 = arith.constant 0 : i32
    %c0_i32_1 = arith.constant 0 : i32
    return %arg1, %arg0, %c0_i32, %c0_i32_0 : i32, i32, i32, i32
  }
  func.func @transform_2(%arg0: i32, %arg1: i32) -> (i32, i32) {
    %c0_i32 = arith.constant 0 : i32
    %c0_i32_0 = arith.constant 0 : i32
    %c0_i32_1 = arith.constant 0 : i32
    return %c0_i32, %c0_i32_0 : i32, i32
  }
  func.func @transform_3(%arg0: i32, %arg1: i32) -> (i32, i32) {
    %c0_i32 = arith.constant 0 : i32
    %c0_i32_0 = arith.constant 0 : i32
    %c0_i32_1 = arith.constant 0 : i32
    return %c0_i32, %c0_i32_0 : i32, i32
  }
  func.func @transform_4(%arg0: i32, %arg1: i32) -> (i32, i32) {
    %c0_i32 = arith.constant 0 : i32
    %c0_i32_0 = arith.constant 0 : i32
    %c0_i32_1 = arith.constant 0 : i32
    return %c0_i32, %c0_i32_0 : i32, i32
  }
  func.func @transform_5(%arg0: i32, %arg1: i32) -> (i32, i32) {
    %c0_i32 = arith.constant 0 : i32
    %c0_i32_0 = arith.constant 0 : i32
    %c0_i32_1 = arith.constant 0 : i32
    return %c0_i32, %c0_i32_0 : i32, i32
  }
  func.func @transform_6(%arg0: i32, %arg1: i32) -> (i32, i32) {
    %c0_i32 = arith.constant 0 : i32
    %c0_i32_0 = arith.constant 0 : i32
    %c0_i32_1 = arith.constant 0 : i32
    return %c0_i32, %c0_i32_0 : i32, i32
  }
  func.func @transform_7(%arg0: i32, %arg1: i32) -> (i32, i32) {
    %c0_i32 = arith.constant 0 : i32
    %c0_i32_0 = arith.constant 0 : i32
    %c0_i32_1 = arith.constant 0 : i32
    return %c0_i32, %c0_i32_0 : i32, i32
  }
  func.func @transform_8(%arg0: i32, %arg1: i32) -> (i32, i32) {
    %c0_i32 = arith.constant 0 : i32
    %c0_i32_0 = arith.constant 0 : i32
    %c0_i32_1 = arith.constant 0 : i32
    return %c0_i32, %c0_i32_0 : i32, i32
  }
  func.func @transform_9(%arg0: i32, %arg1: i32) -> (i32, i32) {
    %c0_i32 = arith.constant 0 : i32
    %c0_i32_0 = arith.constant 0 : i32
    %c0_i32_1 = arith.constant 0 : i32
    return %c0_i32, %c0_i32_0 : i32, i32
  }
  func.func @transform_10(%arg0: i32, %arg1: i32) -> (i32, i32) {
    %c0_i32 = arith.constant 0 : i32
    %c0_i32_0 = arith.constant 0 : i32
    %c0_i32_1 = arith.constant 0 : i32
    return %c0_i32, %c0_i32_0 : i32, i32
  }
  func.func @transform_11(%arg0: i32, %arg1: i32) -> (i32, i32) {
    %c0_i32 = arith.constant 0 : i32
    %c0_i32_0 = arith.constant 0 : i32
    %c0_i32_1 = arith.constant 0 : i32
    return %c0_i32, %c0_i32_0 : i32, i32
  }
  func.func @transform_12(%arg0: i32, %arg1: i32) -> (i32, i32) {
    %c0_i32 = arith.constant 0 : i32
    %c0_i32_0 = arith.constant 0 : i32
    %c0_i32_1 = arith.constant 0 : i32
    return %c0_i32, %c0_i32_0 : i32, i32
  }
  func.func @transform_13(%arg0: i32, %arg1: i32) -> (i32, i32) {
    %c0_i32 = arith.constant 0 : i32
    %c0_i32_0 = arith.constant 0 : i32
    %c0_i32_1 = arith.constant 0 : i32
    return %c0_i32, %c0_i32_0 : i32, i32
  }
  func.func @transform_14(%arg0: i32, %arg1: i32) -> (i32, i32) {
    %c0_i32 = arith.constant 0 : i32
    %c0_i32_0 = arith.constant 0 : i32
    return %arg0, %c0_i32 : i32, i32
  }
}

</mosaic_0001>

<llo_original>
// kernel: tpu_custom_call.1
$region0: #{tpu_custom_call.1}
  #allocation0 [shape = 'u32[]', space=smem, size = 0x4, offset = 0x4, fixed_abs, tag = 'smem constant byte address 0x4 - core index']
  #allocation1 [shape = 'u32[144,128]{1,0:T(1,128)}', space=vmem, size = 0x12000, scoped, tag = 'internal scratch']
  #allocation2 [shape = 'bf16[8,8,32]{2,1,0:T(8,128)(2,1)}', space=vmem, size = 0x4000, scoped, tag = 'scratch operand']
  #allocation3 [shape = 'f32[8,32]{1,0:T(8,128)}', space=vmem, size = 0x1000, scoped, tag = 'scratch operand']
  %s0 = inlined_call_operand.hbm [shape: f32[4], index: 0, kind: input, shape index: {}]
  %s1 = inlined_call_operand.hbm [shape: f32[4,8,8,32], index: 1, kind: input, shape index: {}]
  %s2 = inlined_call_operand.hbm [shape: bf16[32,96], index: 2, kind: input, shape index: {}]
  %s3 = inlined_call_operand.vmem [shape: f32[1,96], index: 3, kind: input, shape index: {}]
  %s4 = inlined_call_operand.hbm [shape: bf16[32,256], index: 4, kind: input, shape index: {}]
  %s5 = inlined_call_operand.vmem [shape: f32[1,256], index: 5, kind: input, shape index: {}]
  %s6 = inlined_call_operand.vmem [shape: f32[1,256], index: 6, kind: input, shape index: {}]
  %s7 = inlined_call_operand.vmem [shape: f32[1,256], index: 7, kind: input, shape index: {}]
  %s8 = inlined_call_operand.hbm [shape: bf16[256,128], index: 8, kind: input, shape index: {}]
  %s9 = inlined_call_operand.vmem [shape: f32[1,128], index: 9, kind: input, shape index: {}]
  %s10 = inlined_call_operand.vmem [shape: f32[1,128], index: 10, kind: input, shape index: {}]
  %s11 = inlined_call_operand.vmem [shape: f32[1,128], index: 11, kind: input, shape index: {}]
  %s12 = inlined_call_operand.hbm [shape: bf16[128,128], index: 12, kind: input, shape index: {}]
  %s13 = inlined_call_operand.vmem [shape: f32[1,128], index: 13, kind: input, shape index: {}]
  %s14 = inlined_call_operand.hbm [shape: f32[8,128], index: 14, kind: output, shape index: {}]
  %s15 = sld [smem:[#allocation0]]
  $region121: #{tpu_custom_call.1} parent=0
    _
  %s17 = ssub.s32 1, %s15
  %s18 = scalar_select 0, %s17, %s15
  $region1: #{tpu_custom_call.1} parent=0
    #allocation4 [shape = 'u8[512]{0}', space=smem, size = 0x200, scoped, tag = 'input window, operand 0, single buffered']
    #allocation5 [shape = 's32[2]{0}', space=sflag, size = 0x8, scoped, tag = 'scoped memory for tpu_custom_call.1']
    #allocation6 [shape = 's32[2]{0}', space=sflag, size = 0x8, scoped, tag = 'scoped memory for tpu_custom_call.1']
    #allocation7 [shape = 's32[2]{0}', space=sflag, size = 0x8, scoped, tag = 'scoped memory for tpu_custom_call.1']
    #allocation8 [shape = 'u8[65536]{0}', space=vmem, size = 0x10000, scoped, tag = 'input window, operand 1']
    #allocation9 [shape = 'u8[8192]{0}', space=vmem, size = 0x2000, scoped, tag = 'input window, operand 2, single buffered']
    #allocation10 [shape = 's32[1]{0}', space=sflag, size = 0x4, scoped, tag = 'scoped memory for tpu_custom_call.1']
    #allocation11 [shape = 'u8[16384]{0}', space=vmem, size = 0x4000, scoped, tag = 'input window, operand 4, single buffered']
    #allocation12 [shape = 'u8[65536]{0}', space=vmem, size = 0x10000, scoped, tag = 'input window, operand 8, single buffered']
    #allocation13 [shape = 's32[1]{0}', space=sflag, size = 0x4, scoped, tag = 'scoped memory for tpu_custom_call.1']
    #allocation14 [shape = 'u8[32768]{0}', space=vmem, size = 0x8000, scoped, tag = 'input window, operand 12, single buffered']
    #allocation15 [shape = 'u8[4096]{0}', space=vmem, size = 0x1000, scoped, tag = 'output window, operand 0, single buffered']
    %19 = vsyncpa [#allocation7], 0
    %20 = vsyncpa [#allocation5], 0
    %s21 = scalar_lea.sflag [#allocation5], 1
    %22 = vsyncpa %s21, 0
    %23 = vsyncpa [#allocation10], 0
    %24 = vsyncpa [#allocation13], 0
    %25 = vsyncpa [#allocation6], 0
    loop: start=0, step=1, limit=6
    $region2: #{tpu_custom_call.1} parent=1 // loop_pre_header
      _
    $region3: #{tpu_custom_call.1} parent=1 // loop_header
      %s27 = sphi 0, %s31
      %p28 = scmp.ge.s32.totalorder %s27, 6
      %s34 = sphi 0, %s46
      %s35 = sphi 0, %s42
      %s36 = sphi 0, %s34
      %s37 = sphi 0, %s35
      %s38 = sphi 0, %s36
      %s39 = sphi 0, %s37
      %s47 = sphi 0, %s47
      %s49 = sphi 0, %s47
      %s50 = sphi 0, %s49
      %s64 = sphi 0, %s50
      %s72 = sphi 0, %s74
      %s75 = sphi 0, %s72
      %s76 = sphi 0, %s75
      %s92 = sphi 0, %s76
      %s96 = sphi 0, %s96
      %s98 = sphi 0, %s96
      %s99 = sphi 0, %s98
      %s113 = sphi 0, %s99
      %s117 = sphi 0, %s117
      %s119 = sphi 0, %s117
      %s120 = sphi 0, %s119
      %s134 = sphi 0, %s120
      %s138 = sphi 0, %s138
      %s140 = sphi 0, %s138
      %s141 = sphi 0, %s140
      %s155 = sphi 0, %s141
      %s159 = sphi 0, %s159
      %s161 = sphi 0, %s159
      %s162 = sphi 0, %s161
      %s176 = sphi 0, %s162
      %s180 = sphi 0, %s180
      %s182 = sphi 0, %s180
      %s183 = sphi 0, %s182
      %s197 = sphi 0, %s183
      %s201 = sphi 0, %s201
      %s203 = sphi 0, %s201
      %s204 = sphi 0, %s203
      %s218 = sphi 0, %s204
      %s222 = sphi 0, %s222
      %s224 = sphi 0, %s222
      %s225 = sphi 0, %s224
      %s239 = sphi 0, %s225
      %s243 = sphi 0, %s243
      %s245 = sphi 0, %s243
      %s246 = sphi 0, %s245
      %s260 = sphi 0, %s246
      %s264 = sphi 0, %s264
      %s266 = sphi 0, %s264
      %s267 = sphi 0, %s266
      %s281 = sphi 0, %s267
      %s285 = sphi 0, %s285
      %s287 = sphi 0, %s285
      %s288 = sphi 0, %s287
      %s302 = sphi 0, %s288
      %s306 = sphi 0, %s306
      %s308 = sphi 0, %s306
      %s309 = sphi 0, %s308
      %s323 = sphi 0, %s309
      %s327 = sphi 0, %s327
      %s329 = sphi 0, %s327
      %s330 = sphi 0, %s329
      %s344 = sphi 0, %s330
      %s350 = sphi 0, %s352
      %s353 = sphi 0, %s350
      %s354 = sphi 0, %s353
      %s370 = sphi 0, %s354
    $region4: #{tpu_custom_call.1} parent=1 // loop_header_branch
      %30 = sbr.rel (%p28) target = $region8
    $region5: #{tpu_custom_call.1} parent=1 // loop_body
      %s32 = ssub.s32 %s27, 1
      %s33 = ssub.s32 %s27, 2
      %s40 = sadd.s32 1, %s35
      %p41 = scmp.ge.s32.totalorder %s40, 4
      %s42 = scalar_select %p41, 0, %s40
      %s43 = sadd.s32 1, %s34
      %s44 = scalar_select %p41, %s43, %s34
      %p45 = scmp.ge.s32.totalorder %s44, 1
      %s46 = scalar_select %p45, 0, %s44
      %s48 = sadd.s32 %s47, 1
      %p51 = scmp.eq.s32.totalorder %s27, 3
      %p52 = scmp.ne.s32.totalorder %s47, %s49
      %p53 = scmp.eq.s32.totalorder %s27, 0
      %p54 = por %p52, %p53
      %p55 = scmp.ne.s32.totalorder %s47, %s49
      %p56 = scmp.eq.s32.totalorder %s32, 3
      %p57 = por %p55, %p56
      %p58 = scmp.ne.s32.totalorder %s49, %s50
      %p59 = scmp.eq.s32.totalorder %s32, 0
      %p60 = por %p58, %p59
      %p61 = scmp.ne.s32.totalorder %s49, %s50
      %p62 = scmp.eq.s32.totalorder %s33, 3
      %p63 = por %p61, %p62
      %p65 = scmp.ne.s32.totalorder %s50, %s64
      %p66 = scmp.eq.s32.totalorder %s33, 0
      %p67 = por %p65, %p66
      %s68 = ssub.s32 %s35, %s42
      %s69 = ssub.s32 %s34, %s46
      %s70 = sor.u32 %s68, %s69
      %p71 = scmp.eq.s32.totalorder %s70, 0
      %s73 = sadd.s32 %s72, 1
      %s74 = scalar_select %p71, %s72, %s73
      %p77 = pneg %p71
      %p78 = scmp.eq.s32.totalorder %s27, 3
      %p79 = por %p77, %p78
      %p80 = scmp.ne.s32.totalorder %s72, %s75
      %p81 = scmp.eq.s32.totalorder %s27, 0
      %p82 = por %p80, %p81
      %p83 = scmp.ne.s32.totalorder %s72, %s75
      %p84 = scmp.eq.s32.totalorder %s32, 3
      %p85 = por %p83, %p84
      %p86 = scmp.ne.s32.totalorder %s75, %s76
      %p87 = scmp.eq.s32.totalorder %s32, 0
      %p88 = por %p86, %p87
      %p89 = scmp.ne.s32.totalorder %s75, %s76
      %p90 = scmp.eq.s32.totalorder %s33, 3
      %p91 = por %p89, %p90
      %p93 = scmp.ne.s32.totalorder %s76, %s92
      %p94 = scmp.eq.s32.totalorder %s33, 0
      %p95 = por %p93, %p94
      %s97 = sadd.s32 %s96, 1
      %p100 = scmp.eq.s32.totalorder %s27, 3
      %p101 = scmp.ne.s32.totalorder %s96, %s98
      %p102 = scmp.eq.s32.totalorder %s27, 0
      %p103 = por %p101, %p102
      %p104 = scmp.ne.s32.totalorder %s96, %s98
      %p105 = scmp.eq.s32.totalorder %s32, 3
      %p106 = por %p104, %p105
      %p107 = scmp.ne.s32.totalorder %s98, %s99
      %p108 = scmp.eq.s32.totalorder %s32, 0
      %p109 = por %p107, %p108
      %p110 = scmp.ne.s32.totalorder %s98, %s99
      %p111 = scmp.eq.s32.totalorder %s33, 3
      %p112 = por %p110, %p111
      %p114 = scmp.ne.s32.totalorder %s99, %s113
      %p115 = scmp.eq.s32.totalorder %s33, 0
      %p116 = por %p114, %p115
      %s118 = sadd.s32 %s117, 1
      %p121 = scmp.eq.s32.totalorder %s27, 3
      %p122 = scmp.ne.s32.totalorder %s117, %s119
      %p123 = scmp.eq.s32.totalorder %s27, 0
      %p124 = por %p122, %p123
      %p125 = scmp.ne.s32.totalorder %s117, %s119
      %p126 = scmp.eq.s32.totalorder %s32, 3
      %p127 = por %p125, %p126
      %p128 = scmp.ne.s32.totalorder %s119, %s120
      %p129 = scmp.eq.s32.totalorder %s32, 0
      %p130 = por %p128, %p129
      %p131 = scmp.ne.s32.totalorder %s119, %s120
      %p132 = scmp.eq.s32.totalorder %s33, 3
      %p133 = por %p131, %p132
      %p135 = scmp.ne.s32.totalorder %s120, %s134
      %p136 = scmp.eq.s32.totalorder %s33, 0
      %p137 = por %p135, %p136
      %s139 = sadd.s32 %s138, 1
      %p142 = scmp.eq.s32.totalorder %s27, 3
      %p143 = scmp.ne.s32.totalorder %s138, %s140
      %p144 = scmp.eq.s32.totalorder %s27, 0
      %p145 = por %p143, %p144
      %p146 = scmp.ne.s32.totalorder %s138, %s140
      %p147 = scmp.eq.s32.totalorder %s32, 3
      %p148 = por %p146, %p147
      %p149 = scmp.ne.s32.totalorder %s140, %s141
      %p150 = scmp.eq.s32.totalorder %s32, 0
      %p151 = por %p149, %p150
      %p152 = scmp.ne.s32.totalorder %s140, %s141
      %p153 = scmp.eq.s32.totalorder %s33, 3
      %p154 = por %p152, %p153
      %p156 = scmp.ne.s32.totalorder %s141, %s155
      %p157 = scmp.eq.s32.totalorder %s33, 0
      %p158 = por %p156, %p157
      %s160 = sadd.s32 %s159, 1
      %p163 = scmp.eq.s32.totalorder %s27, 3
      %p164 = scmp.ne.s32.totalorder %s159, %s161
      %p165 = scmp.eq.s32.totalorder %s27, 0
      %p166 = por %p164, %p165
      %p167 = scmp.ne.s32.totalorder %s159, %s161
      %p168 = scmp.eq.s32.totalorder %s32, 3
      %p169 = por %p167, %p168
      %p170 = scmp.ne.s32.totalorder %s161, %s162
      %p171 = scmp.eq.s32.totalorder %s32, 0
      %p172 = por %p170, %p171
      %p173 = scmp.ne.s32.totalorder %s161, %s162
      %p174 = scmp.eq.s32.totalorder %s33, 3
      %p175 = por %p173, %p174
      %p177 = scmp.ne.s32.totalorder %s162, %s176
      %p178 = scmp.eq.s32.totalorder %s33, 0
      %p179 = por %p177, %p178
      %s181 = sadd.s32 %s180, 1
      %p184 = scmp.eq.s32.totalorder %s27, 3
      %p185 = scmp.ne.s32.totalorder %s180, %s182
      %p186 = scmp.eq.s32.totalorder %s27, 0
      %p187 = por %p185, %p186
      %p188 = scmp.ne.s32.totalorder %s180, %s182
      %p189 = scmp.eq.s32.totalorder %s32, 3
      %p190 = por %p188, %p189
      %p191 = scmp.ne.s32.totalorder %s182, %s183
      %p192 = scmp.eq.s32.totalorder %s32, 0
      %p193 = por %p191, %p192
      %p194 = scmp.ne.s32.totalorder %s182, %s183
      %p195 = scmp.eq.s32.totalorder %s33, 3
      %p196 = por %p194, %p195
      %p198 = scmp.ne.s32.totalorder %s183, %s197
      %p199 = scmp.eq.s32.totalorder %s33, 0
      %p200 = por %p198, %p199
      %s202 = sadd.s32 %s201, 1
      %p205 = scmp.eq.s32.totalorder %s27, 3
      %p206 = scmp.ne.s32.totalorder %s201, %s203
      %p207 = scmp.eq.s32.totalorder %s27, 0
      %p208 = por %p206, %p207
      %p209 = scmp.ne.s32.totalorder %s201, %s203
      %p210 = scmp.eq.s32.totalorder %s32, 3
      %p211 = por %p209, %p210
      %p212 = scmp.ne.s32.totalorder %s203, %s204
      %p213 = scmp.eq.s32.totalorder %s32, 0
      %p214 = por %p212, %p213
      %p215 = scmp.ne.s32.totalorder %s203, %s204
      %p216 = scmp.eq.s32.totalorder %s33, 3
      %p217 = por %p215, %p216
      %p219 = scmp.ne.s32.totalorder %s204, %s218
      %p220 = scmp.eq.s32.totalorder %s33, 0
      %p221 = por %p219, %p220
      %s223 = sadd.s32 %s222, 1
      %p226 = scmp.eq.s32.totalorder %s27, 3
      %p227 = scmp.ne.s32.totalorder %s222, %s224
      %p228 = scmp.eq.s32.totalorder %s27, 0
      %p229 = por %p227, %p228
      %p230 = scmp.ne.s32.totalorder %s222, %s224
      %p231 = scmp.eq.s32.totalorder %s32, 3
      %p232 = por %p230, %p231
      %p233 = scmp.ne.s32.totalorder %s224, %s225
      %p234 = scmp.eq.s32.totalorder %s32, 0
      %p235 = por %p233, %p234
      %p236 = scmp.ne.s32.totalorder %s224, %s225
      %p237 = scmp.eq.s32.totalorder %s33, 3
      %p238 = por %p236, %p237
      %p240 = scmp.ne.s32.totalorder %s225, %s239
      %p241 = scmp.eq.s32.totalorder %s33, 0
      %p242 = por %p240, %p241
      %s244 = sadd.s32 %s243, 1
      %p247 = scmp.eq.s32.totalorder %s27, 3
      %p248 = scmp.ne.s32.totalorder %s243, %s245
      %p249 = scmp.eq.s32.totalorder %s27, 0
      %p250 = por %p248, %p249
      %p251 = scmp.ne.s32.totalorder %s243, %s245
      %p252 = scmp.eq.s32.totalorder %s32, 3
      %p253 = por %p251, %p252
      %p254 = scmp.ne.s32.totalorder %s245, %s246
      %p255 = scmp.eq.s32.totalorder %s32, 0
      %p256 = por %p254, %p255
      %p257 = scmp.ne.s32.totalorder %s245, %s246
      %p258 = scmp.eq.s32.totalorder %s33, 3
      %p259 = por %p257, %p258
      %p261 = scmp.ne.s32.totalorder %s246, %s260
      %p262 = scmp.eq.s32.totalorder %s33, 0
      %p263 = por %p261, %p262
      %s265 = sadd.s32 %s264, 1
      %p268 = scmp.eq.s32.totalorder %s27, 3
      %p269 = scmp.ne.s32.totalorder %s264, %s266
      %p270 = scmp.eq.s32.totalorder %s27, 0
      %p271 = por %p269, %p270
      %p272 = scmp.ne.s32.totalorder %s264, %s266
      %p273 = scmp.eq.s32.totalorder %s32, 3
      %p274 = por %p272, %p273
      %p275 = scmp.ne.s32.totalorder %s266, %s267
      %p276 = scmp.eq.s32.totalorder %s32, 0
      %p277 = por %p275, %p276
      %p278 = scmp.ne.s32.totalorder %s266, %s267
      %p279 = scmp.eq.s32.totalorder %s33, 3
      %p280 = por %p278, %p279
      %p282 = scmp.ne.s32.totalorder %s267, %s281
      %p283 = scmp.eq.s32.totalorder %s33, 0
      %p284 = por %p282, %p283
      %s286 = sadd.s32 %s285, 1
      %p289 = scmp.eq.s32.totalorder %s27, 3
      %p290 = scmp.ne.s32.totalorder %s285, %s287
      %p291 = scmp.eq.s32.totalorder %s27, 0
      %p292 = por %p290, %p291
      %p293 = scmp.ne.s32.totalorder %s285, %s287
      %p294 = scmp.eq.s32.totalorder %s32, 3
      %p295 = por %p293, %p294
      %p296 = scmp.ne.s32.totalorder %s287, %s288
      %p297 = scmp.eq.s32.totalorder %s32, 0
      %p298 = por %p296, %p297
      %p299 = scmp.ne.s32.totalorder %s287, %s288
      %p300 = scmp.eq.s32.totalorder %s33, 3
      %p301 = por %p299, %p300
      %p303 = scmp.ne.s32.totalorder %s288, %s302
      %p304 = scmp.eq.s32.totalorder %s33, 0
      %p305 = por %p303, %p304
      %s307 = sadd.s32 %s306, 1
      %p310 = scmp.eq.s32.totalorder %s27, 3
      %p311 = scmp.ne.s32.totalorder %s306, %s308
      %p312 = scmp.eq.s32.totalorder %s27, 0
      %p313 = por %p311, %p312
      %p314 = scmp.ne.s32.totalorder %s306, %s308
      %p315 = scmp.eq.s32.totalorder %s32, 3
      %p316 = por %p314, %p315
      %p317 = scmp.ne.s32.totalorder %s308, %s309
      %p318 = scmp.eq.s32.totalorder %s32, 0
      %p319 = por %p317, %p318
      %p320 = scmp.ne.s32.totalorder %s308, %s309
      %p321 = scmp.eq.s32.totalorder %s33, 3
      %p322 = por %p320, %p321
      %p324 = scmp.ne.s32.totalorder %s309, %s323
      %p325 = scmp.eq.s32.totalorder %s33, 0
      %p326 = por %p324, %p325
      %s328 = sadd.s32 %s327, 1
      %p331 = scmp.eq.s32.totalorder %s27, 3
      %p332 = scmp.ne.s32.totalorder %s327, %s329
      %p333 = scmp.eq.s32.totalorder %s27, 0
      %p334 = por %p332, %p333
      %p335 = scmp.ne.s32.totalorder %s327, %s329
      %p336 = scmp.eq.s32.totalorder %s32, 3
      %p337 = por %p335, %p336
      %p338 = scmp.ne.s32.totalorder %s329, %s330
      %p339 = scmp.eq.s32.totalorder %s32, 0
      %p340 = por %p338, %p339
      %p341 = scmp.ne.s32.totalorder %s329, %s330
      %p342 = scmp.eq.s32.totalorder %s33, 3
      %p343 = por %p341, %p342
      %p345 = scmp.ne.s32.totalorder %s330, %s344
      %p346 = scmp.eq.s32.totalorder %s33, 0
      %p347 = por %p345, %p346
      %s348 = ssub.s32 %s34, %s46
      %p349 = scmp.eq.s32.totalorder %s348, 0
      %s351 = sadd.s32 %s350, 1
      %s352 = scalar_select %p349, %s350, %s351
      %p355 = pneg %p349
      %p356 = scmp.eq.s32.totalorder %s27, 3
      %p357 = por %p355, %p356
      %p358 = scmp.ne.s32.totalorder %s350, %s353
      %p359 = scmp.eq.s32.totalorder %s27, 0
      %p360 = por %p358, %p359
      %p361 = scmp.ne.s32.totalorder %s350, %s353
      %p362 = scmp.eq.s32.totalorder %s32, 3
      %p363 = por %p361, %p362
      %p364 = scmp.ne.s32.totalorder %s353, %s354
      %p365 = scmp.eq.s32.totalorder %s32, 0
      %p366 = por %p364, %p365
      %p367 = scmp.ne.s32.totalorder %s353, %s354
      %p368 = scmp.eq.s32.totalorder %s33, 3
      %p369 = por %p367, %p368
      %p371 = scmp.ne.s32.totalorder %s354, %s370
      %p372 = scmp.eq.s32.totalorder %s33, 0
      %p373 = por %p371, %p372
      %p374 = scmp.le.s32.totalorder 1, %s27
      %p375 = scmp.lt.s32.totalorder %s27, 5
      %p376 = pnand %p374, %p375
      %p377 = pneg %p376
      // Predicated region
      $region9: #{tpu_custom_call.1} parent=5 // pred_check
        _
      $region10: #{tpu_custom_call.1} parent=5 // pred_check_branch
        %379 = sbr.rel (%p376) target = $region12
      $region11: #{tpu_custom_call.1} parent=5 // pred_region
        %s380 = ssub.s32 %s27, 1
        // Predicated region
        $region13: #{tpu_custom_call.1} parent=11 // pred_check
          %p381 = pneg %p60
        $region14: #{tpu_custom_call.1} parent=11 // pred_check_branch
          %383 = sbr.rel (%p381) target = $region16
        $region15: #{tpu_custom_call.1} parent=11 // pred_region
          %s385 = ssub.s32 16, 16
          %386 = vsyncadd [#allocation7], %s385
          %389 = dma.hbm_to_smem %s0, 16, [#allocation4], [#allocation7]
        $region16: #{tpu_custom_call.1} parent=11 // pred_fallthru
          _
        // Predicated region
        $region17: #{tpu_custom_call.1} parent=11 // pred_check
          %p390 = pneg %p109
        $region18: #{tpu_custom_call.1} parent=11 // pred_check_branch
          %392 = sbr.rel (%p390) target = $region20
        $region19: #{tpu_custom_call.1} parent=11 // pred_region
          %s394 = ssub.s32 256, 256
          %395 = vsyncadd [#allocation10], %s394
          %s396 = sshll.u32 [#allocation9], 4
          %s397 = int_to_ptr.vmem [resolvable:$true] %s396
          %402 = dma.hbm_to_vmem [thread:$0]  %s2, 256, %s397, [#allocation10], 64, 64, 4
        $region20: #{tpu_custom_call.1} parent=11 // pred_fallthru
          _
        // Predicated region
        $region21: #{tpu_custom_call.1} parent=11 // pred_check
          %p403 = pneg %p130
        $region22: #{tpu_custom_call.1} parent=11 // pred_check_branch
          %405 = sbr.rel (%p403) target = $region24
        $region23: #{tpu_custom_call.1} parent=11 // pred_region
          _
        $region24: #{tpu_custom_call.1} parent=11 // pred_fallthru
          _
        // Predicated region
        $region25: #{tpu_custom_call.1} parent=11 // pred_check
          %p406 = pneg %p151
        $region26: #{tpu_custom_call.1} parent=11 // pred_check_branch
          %408 = sbr.rel (%p406) target = $region28
        $region27: #{tpu_custom_call.1} parent=11 // pred_region
          %s410 = ssub.s32 512, 512
          %411 = vsyncadd [#allocation10], %s410
          %s412 = sshll.u32 [#allocation11], 4
          %s413 = int_to_ptr.vmem [resolvable:$true] %s412
          %418 = dma.hbm_to_vmem [thread:$0]  %s4, 512, %s413, [#allocation10], 128, 128, 8
        $region28: #{tpu_custom_call.1} parent=11 // pred_fallthru
          _
        // Predicated region
        $region29: #{tpu_custom_call.1} parent=11 // pred_check
          %p419 = pneg %p172
        $region30: #{tpu_custom_call.1} parent=11 // pred_check_branch
          %421 = sbr.rel (%p419) target = $region32
        $region31: #{tpu_custom_call.1} parent=11 // pred_region
          _
        $region32: #{tpu_custom_call.1} parent=11 // pred_fallthru
          _
        // Predicated region
        $region33: #{tpu_custom_call.1} parent=11 // pred_check
          %p422 = pneg %p193
        $region34: #{tpu_custom_call.1} parent=11 // pred_check_branch
          %424 = sbr.rel (%p422) target = $region36
        $region35: #{tpu_custom_call.1} parent=11 // pred_region
          _
        $region36: #{tpu_custom_call.1} parent=11 // pred_fallthru
          _
        // Predicated region
        $region37: #{tpu_custom_call.1} parent=11 // pred_check
          %p425 = pneg %p214
        $region38: #{tpu_custom_call.1} parent=11 // pred_check_branch
          %427 = sbr.rel (%p425) target = $region40
        $region39: #{tpu_custom_call.1} parent=11 // pred_region
          _
        $region40: #{tpu_custom_call.1} parent=11 // pred_fallthru
          _
        // Predicated region
        $region41: #{tpu_custom_call.1} parent=11 // pred_check
          %p428 = pneg %p235
        $region42: #{tpu_custom_call.1} parent=11 // pred_check_branch
          %430 = sbr.rel (%p428) target = $region44
        $region43: #{tpu_custom_call.1} parent=11 // pred_region
          %s432 = ssub.s32 2048, 2048
          %433 = vsyncadd [#allocation13], %s432
          %s434 = sshll.u32 [#allocation12], 4
          %s435 = int_to_ptr.vmem [resolvable:$true] %s434
          %440 = dma.hbm_to_vmem [thread:$0]  %s8, 2048, %s435, [#allocation13], 64, 64, 4
        $region44: #{tpu_custom_call.1} parent=11 // pred_fallthru
          _
        // Predicated region
        $region45: #{tpu_custom_call.1} parent=11 // pred_check
          %p441 = pneg %p256
        $region46: #{tpu_custom_call.1} parent=11 // pred_check_branch
          %443 = sbr.rel (%p441) target = $region48
        $region47: #{tpu_custom_call.1} parent=11 // pred_region
          _
        $region48: #{tpu_custom_call.1} parent=11 // pred_fallthru
          _
        // Predicated region
        $region49: #{tpu_custom_call.1} parent=11 // pred_check
          %p444 = pneg %p277
        $region50: #{tpu_custom_call.1} parent=11 // pred_check_branch
          %446 = sbr.rel (%p444) target = $region52
        $region51: #{tpu_custom_call.1} parent=11 // pred_region
          _
        $region52: #{tpu_custom_call.1} parent=11 // pred_fallthru
          _
        // Predicated region
        $region53: #{tpu_custom_call.1} parent=11 // pred_check
          %p447 = pneg %p298
        $region54: #{tpu_custom_call.1} parent=11 // pred_check_branch
          %449 = sbr.rel (%p447) target = $region56
        $region55: #{tpu_custom_call.1} parent=11 // pred_region
          _
        $region56: #{tpu_custom_call.1} parent=11 // pred_fallthru
          _
        // Predicated region
        $region57: #{tpu_custom_call.1} parent=11 // pred_check
          %p450 = pneg %p319
        $region58: #{tpu_custom_call.1} parent=11 // pred_check_branch
          %452 = sbr.rel (%p450) target = $region60
        $region59: #{tpu_custom_call.1} parent=11 // pred_region
          %s454 = ssub.s32 1024, 1024
          %455 = vsyncadd [#allocation13], %s454
          %s456 = sshll.u32 [#allocation14], 4
          %s457 = int_to_ptr.vmem [resolvable:$true] %s456
          %462 = dma.hbm_to_vmem [thread:$0]  %s12, 1024, %s457, [#allocation13], 64, 64, 4
        $region60: #{tpu_custom_call.1} parent=11 // pred_fallthru
          _
        // Predicated region
        $region61: #{tpu_custom_call.1} parent=11 // pred_check
          %p463 = pneg %p340
        $region62: #{tpu_custom_call.1} parent=11 // pred_check_branch
          %465 = sbr.rel (%p463) target = $region64
        $region63: #{tpu_custom_call.1} parent=11 // pred_region
          _
        $region64: #{tpu_custom_call.1} parent=11 // pred_fallthru
          _
      $region12: #{tpu_custom_call.1} parent=5 // pred_fallthru
        _
      %p466 = scmp.lt.s32.totalorder %s27, 4
      // Predicated region
      $region65: #{tpu_custom_call.1} parent=5 // pred_check
        %p467 = pneg %p466
      $region66: #{tpu_custom_call.1} parent=5 // pred_check_branch
        %469 = sbr.rel (%p467) target = $region68
      $region67: #{tpu_custom_call.1} parent=5 // pred_region
        // Predicated region
        $region69: #{tpu_custom_call.1} parent=67 // pred_check
          %p470 = pneg %p82
        $region70: #{tpu_custom_call.1} parent=67 // pred_check_branch
          %472 = sbr.rel (%p470) target = $region72
        $region71: #{tpu_custom_call.1} parent=67 // pred_region
          %s473 = sand.u32 %s72, 1
          %s474 = scalar_lea.sflag [#allocation5], %s473
          %s475 = sand.u32 %s72, 1
          %s476 = smul.addr %s475, 64
          %s477 = scalar_lea.vmem [#allocation8], %s476
          %s478 = smul.u32 8, %s34
          %s480 = ssub.s32 1024, 1024
          %481 = vsyncadd %s474, %s480
          %s482 = smul.addr %s35, 8
          %s483 = sadd.s32 %s478, %s482
          %s484 = smul.addr %s483, 128
          %s485 = scalar_lea.hbm %s1, %s484
          %s486 = sshll.u32 %s477, 4
          %s487 = int_to_ptr.vmem [resolvable:$true] %s486
          %492 = dma.hbm_to_vmem [thread:$0]  %s485, 1024, %s487, %s474, 128, 128, 8
        $region72: #{tpu_custom_call.1} parent=67 // pred_fallthru
          _
      $region68: #{tpu_custom_call.1} parent=5 // pred_fallthru
        _
      %p493 = scmp.le.s32.totalorder 1, %s27
      %p494 = scmp.lt.s32.totalorder %s27, 5
      %p495 = pnand %p493, %p494
      %p496 = pneg %p495
      // Predicated region
      $region73: #{tpu_custom_call.1} parent=5 // pred_check
        _
      $region74: #{tpu_custom_call.1} parent=5 // pred_check_branch
        %498 = sbr.rel (%p495) target = $region76
      $region75: #{tpu_custom_call.1} parent=5 // pred_region
        %s499 = ssub.s32 %s27, 1
        // Predicated region
        $region77: #{tpu_custom_call.1} parent=75 // pred_check
          %p500 = pneg %p60
        $region78: #{tpu_custom_call.1} parent=75 // pred_check_branch
          %502 = sbr.rel (%p500) target = $region80
        $region79: #{tpu_custom_call.1} parent=75 // pred_region
          %503 = dma.done [#allocation7], 16
        $region80: #{tpu_custom_call.1} parent=75 // pred_fallthru
          _
        %s504 = sand.u32 %s75, 1
        %s505 = scalar_lea.sflag [#allocation5], %s504
        %s506 = sand.u32 %s75, 1
        %s507 = smul.addr %s506, 64
        %s508 = scalar_lea.vmem [#allocation8], %s507
        // Predicated region
        $region81: #{tpu_custom_call.1} parent=75 // pred_check
          %p509 = pneg %p88
        $region82: #{tpu_custom_call.1} parent=75 // pred_check_branch
          %511 = sbr.rel (%p509) target = $region84
        $region83: #{tpu_custom_call.1} parent=75 // pred_region
          %512 = dma.done %s505, 1024
        $region84: #{tpu_custom_call.1} parent=75 // pred_fallthru
          _
        // Predicated region
        $region85: #{tpu_custom_call.1} parent=75 // pred_check
          %p513 = pneg %p109
        $region86: #{tpu_custom_call.1} parent=75 // pred_check_branch
          %515 = sbr.rel (%p513) target = $region88
        $region87: #{tpu_custom_call.1} parent=75 // pred_region
          %516 = dma.done [#allocation10], 256
        $region88: #{tpu_custom_call.1} parent=75 // pred_fallthru
          _
        // Predicated region
        $region89: #{tpu_custom_call.1} parent=75 // pred_check
          %p517 = pneg %p151
        $region90: #{tpu_custom_call.1} parent=75 // pred_check_branch
          %519 = sbr.rel (%p517) target = $region92
        $region91: #{tpu_custom_call.1} parent=75 // pred_region
          %520 = dma.done [#allocation10], 512
        $region92: #{tpu_custom_call.1} parent=75 // pred_fallthru
          _
        // Predicated region
        $region93: #{tpu_custom_call.1} parent=75 // pred_check
          %p521 = pneg %p235
        $region94: #{tpu_custom_call.1} parent=75 // pred_check_branch
          %523 = sbr.rel (%p521) target = $region96
        $region95: #{tpu_custom_call.1} parent=75 // pred_region
          %524 = dma.done [#allocation13], 2048
        $region96: #{tpu_custom_call.1} parent=75 // pred_fallthru
          _
        // Predicated region
        $region97: #{tpu_custom_call.1} parent=75 // pred_check
          %p525 = pneg %p319
        $region98: #{tpu_custom_call.1} parent=75 // pred_check_branch
          %527 = sbr.rel (%p525) target = $region100
        $region99: #{tpu_custom_call.1} parent=75 // pred_region
          %528 = dma.done [#allocation13], 1024
        $region100: #{tpu_custom_call.1} parent=75 // pred_fallthru
          _
        %529 = sfence
        %p530 = pneg %p60
        %p531 = pneg %p57
        %s532 = sand.u32 %s75, 1
        %s533 = scalar_lea.sflag [#allocation5], %s532
        %s534 = sand.u32 %s75, 1
        %s535 = smul.addr %s534, 64
        %s536 = scalar_lea.vmem [#allocation8], %s535
        %p537 = pneg %p88
        %p538 = pneg %p85
        %p539 = pneg %p109
        %p540 = pneg %p106
        %p541 = pneg %p130
        %p542 = pneg %p127
        %p543 = pneg %p151
        %p544 = pneg %p148
        %p545 = pneg %p172
        %p546 = pneg %p169
        %p547 = pneg %p193
        %p548 = pneg %p190
        %p549 = pneg %p214
        %p550 = pneg %p211
        %p551 = pneg %p235
        %p552 = pneg %p232
        %p553 = pneg %p256
        %p554 = pneg %p253
        %p555 = pneg %p277
        %p556 = pneg %p274
        %p557 = pneg %p298
        %p558 = pneg %p295
        %p559 = pneg %p319
        %p560 = pneg %p316
        %p561 = pneg %p340
        %p562 = pneg %p337
        %p563 = pneg %p366
        %p564 = pneg %p363
        %s565 = smul.u32 8, %s36
        %p567 = scmp.eq.s32.totalorder %s37, 0
        // Predicated region
        $region101: #{tpu_custom_call.1} parent=75 // pred_check
          %p568 = pneg %p567
        $region102: #{tpu_custom_call.1} parent=75 // pred_check_branch
          %570 = sbr.rel (%p568) target = $region104
        $region103: #{tpu_custom_call.1} parent=75 // pred_region
          %vm571 = vcmask 257024
          %572 = vst.msk [vmem:[#allocation2] sm:$0xf] %vm571, 0
          %573 = vst.msk [vmem:[#allocation2 + $0x4] sm:$0xf] %vm571, 0
          %574 = vst.msk [vmem:[#allocation2 + $0x8] sm:$0xf] %vm571, 0
          %575 = vst.msk [vmem:[#allocation2 + $0xc] sm:$0xf] %vm571, 0
          %576 = vst.msk [vmem:[#allocation2 + $0x10] sm:$0xf] %vm571, 0
          %577 = vst.msk [vmem:[#allocation2 + $0x14] sm:$0xf] %vm571, 0
          %578 = vst.msk [vmem:[#allocation2 + $0x18] sm:$0xf] %vm571, 0
          %579 = vst.msk [vmem:[#allocation2 + $0x1c] sm:$0xf] %vm571, 0
          %vm580 = vcmask 261120
          %581 = vst.msk [vmem:[#allocation3] sm:$0xff] %vm580, 0.0
        $region104: #{tpu_custom_call.1} parent=75 // pred_fallthru
          _
        %s582 = sld [smem:[#allocation4 + %s37]]
        %v583 = vld [vmem:[%s508] sm:$0xff]
        %v584 = vld [vmem:[%s508 + $0x8] sm:$0xff]
        %v585 = vld [vmem:[%s508 + $0x10] sm:$0xff]
        %v586 = vld [vmem:[%s508 + $0x18] sm:$0xff]
        %v587 = vld [vmem:[%s508 + $0x20] sm:$0xff]
        %v588 = vld [vmem:[%s508 + $0x28] sm:$0xff]
        %v589 = vld [vmem:[%s508 + $0x30] sm:$0xff]
        %v590 = vld [vmem:[%s508 + $0x38] sm:$0xff]
        %v591 = vld [vmem:[#allocation2] sm:$0xf]
        %v592 = vld [vmem:[#allocation2 + $0x4] sm:$0xf]
        %v593 = vld [vmem:[#allocation2 + $0x8] sm:$0xf]
        %v594 = vld [vmem:[#allocation2 + $0xc] sm:$0xf]
        %v595 = vld [vmem:[#allocation2 + $0x10] sm:$0xf]
        %v596 = vld [vmem:[#allocation2 + $0x14] sm:$0xf]
        %v597 = vld [vmem:[#allocation2 + $0x18] sm:$0xf]
        %v598 = vld [vmem:[#allocation2 + $0x1c] sm:$0xf]
        %v599 = vstv %s582
        %v600 = vmul.f32 %v599, %v583
        %v601 = vmul.f32 %v599, %v584
        %v602 = vmul.f32 %v599, %v585
        %v603 = vmul.f32 %v599, %v586
        %v604 = vmul.f32 %v599, %v587
        %v605 = vmul.f32 %v599, %v588
        %v606 = vmul.f32 %v599, %v589
        %v607 = vmul.f32 %v599, %v590
        %v608 = vpack.c.bf16 %v600, %v600
        %v609 = vpack.c.bf16 %v601, %v601
        %v610 = vpack.c.bf16 %v602, %v602
        %v611 = vpack.c.bf16 %v603, %v603
        %v612 = vpack.c.bf16 %v604, %v604
        %v613 = vpack.c.bf16 %v605, %v605
        %v614 = vpack.c.bf16 %v606, %v606
        %v615 = vpack.c.bf16 %v607, %v607
        %v616 = vadd.bf16 %v591, %v608
        %v617 = vadd.bf16 %v592, %v609
        %v618 = vadd.bf16 %v593, %v610
        %v619 = vadd.bf16 %v594, %v611
        %v620 = vadd.bf16 %v595, %v612
        %v621 = vadd.bf16 %v596, %v613
        %v622 = vadd.bf16 %v597, %v614
        %v623 = vadd.bf16 %v598, %v615
        %vm624 = vcmask 257024
        %625 = vst.msk [vmem:[#allocation2] sm:$0xf] %vm624, %v616
        %626 = vst.msk [vmem:[#allocation2 + $0x4] sm:$0xf] %vm624, %v617
        %627 = vst.msk [vmem:[#allocation2 + $0x8] sm:$0xf] %vm624, %v618
        %628 = vst.msk [vmem:[#allocation2 + $0xc] sm:$0xf] %vm624, %v619
        %629 = vst.msk [vmem:[#allocation2 + $0x10] sm:$0xf] %vm624, %v620
        %630 = vst.msk [vmem:[#allocation2 + $0x14] sm:$0xf] %vm624, %v621
        %631 = vst.msk [vmem:[#allocation2 + $0x18] sm:$0xf] %vm624, %v622
        %632 = vst.msk [vmem:[#allocation2 + $0x1c] sm:$0xf] %vm624, %v623
        %v633 = vld [vmem:[#allocation3] sm:$0xff]
        %vm634 = vcmask 261120
        %v635 = vsel %vm634, %v583, 0.0
        %v636 = vrot.slane %v635, 4
        %v637 = vadd.f32 %v635, %v636
        %v638 = vrot.slane %v637, 2
        %v639 = vadd.f32 %v637, %v638
        %v640 = vrot.slane %v639, 1
        %v641 = vadd.f32 %v639, %v640
        %v642 = vsel %vm634, %v584, 0.0
        %v643 = vrot.slane %v642, 4
        %v644 = vadd.f32 %v642, %v643
        %v645 = vrot.slane %v644, 2
        %v646 = vadd.f32 %v644, %v645
        %v647 = vrot.slane %v646, 1
        %v648 = vadd.f32 %v646, %v647
        %v649 = vsel %vm634, %v585, 0.0
        %v650 = vrot.slane %v649, 4
        %v651 = vadd.f32 %v649, %v650
        %v652 = vrot.slane %v651, 2
        %v653 = vadd.f32 %v651, %v652
        %v654 = vrot.slane %v653, 1
        %v655 = vadd.f32 %v653, %v654
        %v656 = vsel %vm634, %v586, 0.0
        %v657 = vrot.slane %v656, 4
        %v658 = vadd.f32 %v656, %v657
        %v659 = vrot.slane %v658, 2
        %v660 = vadd.f32 %v658, %v659
        %v661 = vrot.slane %v660, 1
        %v662 = vadd.f32 %v660, %v661
        %v663 = vsel %vm634, %v587, 0.0
        %v664 = vrot.slane %v663, 4
        %v665 = vadd.f32 %v663, %v664
        %v666 = vrot.slane %v665, 2
        %v667 = vadd.f32 %v665, %v666
        %v668 = vrot.slane %v667, 1
        %v669 = vadd.f32 %v667, %v668
        %v670 = vsel %vm634, %v588, 0.0
        %v671 = vrot.slane %v670, 4
        %v672 = vadd.f32 %v670, %v671
        %v673 = vrot.slane %v672, 2
        %v674 = vadd.f32 %v672, %v673
        %v675 = vrot.slane %v674, 1
        %v676 = vadd.f32 %v674, %v675
        %v677 = vsel %vm634, %v589, 0.0
        %v678 = vrot.slane %v677, 4
        %v679 = vadd.f32 %v677, %v678
        %v680 = vrot.slane %v679, 2
        %v681 = vadd.f32 %v679, %v680
        %v682 = vrot.slane %v681, 1
        %v683 = vadd.f32 %v681, %v682
        %v684 = vsel %vm634, %v590, 0.0
        %v685 = vrot.slane %v684, 4
        %v686 = vadd.f32 %v684, %v685
        %v687 = vrot.slane %v686, 2
        %v688 = vadd.f32 %v686, %v687
        %v689 = vrot.slane %v688, 1
        %v690 = vadd.f32 %v688, %v689
        %v691 = vrcp.pop 8.0
        %v692 = vmul.f32 %v641, %v691
        %v693 = vmul.f32 %v648, %v691
        %v694 = vmul.f32 %v655, %v691
        %v695 = vmul.f32 %v662, %v691
        %v696 = vmul.f32 %v669, %v691
        %v697 = vmul.f32 %v676, %v691
        %v698 = vmul.f32 %v683, %v691
        %v699 = vmul.f32 %v690, %v691
        %v700 = vmul.f32 %v599, %v692
        %v701 = vmul.f32 %v599, %v693
        %v702 = vmul.f32 %v599, %v694
        %v703 = vmul.f32 %v599, %v695
        %v704 = vmul.f32 %v599, %v696
        %v705 = vmul.f32 %v599, %v697
        %v706 = vmul.f32 %v599, %v698
        %v707 = vmul.f32 %v599, %v699
        %vm716 = vcmask 1041409
        %v717 = vsel %vm716, %v701, %v700
        %vm718 = vcmask 1042434
        %v719 = vsel %vm718, %v702, %v717
        %vm720 = vcmask 1043459
        %v721 = vsel %vm720, %v703, %v719
        %vm722 = vcmask 1044484
        %v723 = vsel %vm722, %v704, %v721
        %vm724 = vcmask 1045509
        %v725 = vsel %vm724, %v705, %v723
        %vm726 = vcmask 1046534
        %v727 = vsel %vm726, %v706, %v725
        %vm728 = vcmask 1047559
        %v729 = vsel %vm728, %v707, %v727
        %v731 = vadd.f32 %v633, %v729
        %732 = vst.msk [vmem:[#allocation3] sm:$0xff] %vm634, %v731
        %p733 = scmp.eq.s32.totalorder %s37, 3
        // Predicated region
        $region105: #{tpu_custom_call.1} parent=75 // pred_check
          %p734 = pneg %p733
        $region106: #{tpu_custom_call.1} parent=75 // pred_check_branch
          %736 = sbr.rel (%p734) target = $region108
        $region107: #{tpu_custom_call.1} parent=75 // pred_region
          %v737 = vld [vmem:[#allocation2] sm:$0xf]
          %v738 = vld [vmem:[#allocation2 + $0x4] sm:$0xf]
          %v739 = vld [vmem:[#allocation2 + $0x8] sm:$0xf]
          %v740 = vld [vmem:[#allocation2 + $0xc] sm:$0xf]
          %v741 = vld [vmem:[#allocation2 + $0x10] sm:$0xf]
          %v742 = vld [vmem:[#allocation2 + $0x14] sm:$0xf]
          %v743 = vld [vmem:[#allocation2 + $0x18] sm:$0xf]
          %v744 = vld [vmem:[#allocation2 + $0x1c] sm:$0xf]
          %v745 = vld [vmem:[#allocation9] sm:$0xf]
          %v746 = vld [vmem:[#allocation9 + $0x4] sm:$0xf]
          %v747 = vld [vmem:[#allocation9 + $0x8] sm:$0xf]
          %v748 = vld [vmem:[#allocation9 + $0xc] sm:$0xf]
          %v749 = vld [vmem:[%s3] sm:$0x1]
          %v751 = vlaneseq
          %v752 = vshrl.u32 %v751, 7
          %v753 = vsub.s32 0, %v752
          %v754 = vrot.slane %v749, %v753
          %v764 = vunpack.c.l.b16 %v737
          %v765 = vunpack.c.l.b16 %v738
          %v766 = vunpack.c.l.b16 %v739
          %v767 = vunpack.c.l.b16 %v740
          %v768 = vunpack.c.l.b16 %v741
          %v769 = vunpack.c.l.b16 %v742
          %v770 = vunpack.c.l.b16 %v743
          %v771 = vunpack.c.l.b16 %v744
          %v772 = vpack.c.b16 %v765, %v764
          %v773 = vpack.c.b16 %v767, %v766
          %v774 = vpack.c.b16 %v769, %v768
          %v775 = vpack.c.b16 %v771, %v770
          %v780 = vunpack.c.l.b16 %v745
          %v781 = vunpack.c.l.b16 %v746
          %v782 = vunpack.c.l.b16 %v747
          %v783 = vunpack.c.l.b16 %v748
          %v784 = vpack.c.b16 %v781, %v780
          %v785 = vpack.c.b16 %v783, %v782
          %v789 = vsel %vm634, %v772, 0
          %v792 = vsel %vm634, %v773, 0
          %v795 = vsel %vm634, %v774, 0
          %v798 = vsel %vm634, %v775, 0
          %800 = vmatprep.subr.bf16.mxu0 0
          %801 = vmatpush1.bf16.msra.mxu0 0
          %802 = vmatprep.subr.bf16.mxu0 0
          %803 = vmatpush1.bf16.msra.mxu0 0
          %804 = vmatprep.subr.bf16.mxu0 0
          %805 = vmatpush1.bf16.msra.mxu0 0
          %806 = vmatprep.subr.bf16.mxu0 0
          %807 = vmatpush1.bf16.msra.mxu0 0
          %808 = vmatprep.subr.bf16.mxu0 0
          %809 = vmatpush1.bf16.msra.mxu0 0
          %810 = vmatprep.subr.bf16.mxu0 0
          %811 = vmatpush1.bf16.msra.mxu0 0
          %812 = vmatprep.subr.bf16.mxu0 0
          %813 = vmatpush1.bf16.msra.mxu0 %v785
          %814 = vmatprep.subr.bf16.mxu0 0
          %815 = vmatpush1.bf16.msra.mxu0 %v784
          %816 = vmatprep.subr.bf16.mxu0 0
          %817 = vmatpush2.bf16.msra.mxu0 0
          %818 = vmatprep.subr.bf16.mxu0 0
          %819 = vmatpush2.bf16.msra.mxu0 0
          %820 = vmatprep.subr.bf16.mxu0 0
          %821 = vmatpush2.bf16.msra.mxu0 0
          %822 = vmatprep.subr.bf16.mxu0 0
          %823 = vmatpush2.bf16.msra.mxu0 0
          %824 = vmatprep.subr.bf16.mxu0 0
          %825 = vmatpush2.bf16.msra.mxu0 0
          %826 = vmatprep.subr.bf16.mxu0 0
          %827 = vmatpush2.bf16.msra.mxu0 0
          %828 = vmatprep.subr.bf16.mxu0 0
          %829 = vmatpush2.bf16.msra.mxu0 0
          %830 = vmatprep.subr.bf16.mxu0 0
          %831 = vmatpush2.bf16.msra.mxu0 0
          %832 = vmatprep.mubr.bf16.mxu0 0
          %833 = vmatmul.mubr.bf16.gmra.mxu0 %v789
          %v834 = vpop.f32.mrf.mxu0
          %v835 = vadd.f32 %v754, %v834
          %v836 = vpop.f32.mrf.mxu0
          %v837 = vpop.f32.mrf.mxu0
          %v838 = vadd.f32 %v754, %v837
          %v839 = vpop.f32.mrf.mxu0
          %840 = vmatprep.mubr.bf16.mxu0 0
          %841 = vmatmul.mubr.bf16.gmra.mxu0 %v792
          %v842 = vpop.f32.mrf.mxu0
          %v843 = vadd.f32 %v754, %v842
          %v844 = vpop.f32.mrf.mxu0
          %v845 = vpop.f32.mrf.mxu0
          %v846 = vadd.f32 %v754, %v845
          %v847 = vpop.f32.mrf.mxu0
          %848 = vmatprep.mubr.bf16.mxu0 0
          %849 = vmatmul.mubr.bf16.gmra.mxu0 %v795
          %v850 = vpop.f32.mrf.mxu0
          %v851 = vadd.f32 %v754, %v850
          %v852 = vpop.f32.mrf.mxu0
          %v853 = vpop.f32.mrf.mxu0
          %v854 = vadd.f32 %v754, %v853
          %v855 = vpop.f32.mrf.mxu0
          %856 = vmatprep.mubr.bf16.mxu0 0
          %857 = vmatmul.mubr.bf16.gmra.mxu0 %v798
          %v858 = vpop.f32.mrf.mxu0
          %v859 = vadd.f32 %v754, %v858
          %v860 = vpop.f32.mrf.mxu0
          %v861 = vpop.f32.mrf.mxu0
          %v862 = vadd.f32 %v754, %v861
          %v863 = vpop.f32.mrf.mxu0
          %864 = vdwg.mxu0
          %v865 = vpack.c.bf16 %v835, %v835
          %v866 = vpack.c.bf16 %v838, %v838
          %v867 = vpack.c.bf16 %v843, %v843
          %v868 = vpack.c.bf16 %v846, %v846
          %v869 = vpack.c.bf16 %v851, %v851
          %v870 = vpack.c.bf16 %v854, %v854
          %v871 = vpack.c.bf16 %v859, %v859
          %v872 = vpack.c.bf16 %v862, %v862
          %874 = vrot.lane.b32.xlu0 %v865, 96
          %v875 = vpop.permute.xlu0 %874
          %v877 = vsel %vm634, %v865, 0
          %v880 = vsel %vm634, %v875, 0
          %882 = vmatprep.subr.bf16.mxu0 0
          %883 = vmatpush1.bf16.xpose.msra.mxu0 0
          %884 = vmatprep.subr.bf16.mxu0 0
          %885 = vmatpush1.bf16.xpose.msra.mxu0 0
          %886 = vmatprep.subr.bf16.mxu0 0
          %887 = vmatpush1.bf16.xpose.msra.mxu0 0
          %888 = vmatprep.subr.bf16.mxu0 0
          %889 = vmatpush1.bf16.xpose.msra.mxu0 0
          %890 = vmatprep.subr.bf16.mxu0 0
          %891 = vmatpush1.bf16.xpose.msra.mxu0 0
          %892 = vmatprep.subr.bf16.mxu0 0
          %893 = vmatpush1.bf16.xpose.msra.mxu0 0
          %894 = vmatprep.subr.bf16.mxu0 0
          %895 = vmatpush1.bf16.xpose.msra.mxu0 0
          %896 = vmatprep.subr.bf16.mxu0 0
          %897 = vmatpush1.bf16.xpose.msra.mxu0 %v880
          %898 = vmatprep.subr.bf16.mxu0 0
          %899 = vmatpush2.bf16.xpose.msra.mxu0 0
          %900 = vmatprep.subr.bf16.mxu0 0
          %901 = vmatpush2.bf16.xpose.msra.mxu0 0
          %902 = vmatprep.subr.bf16.mxu0 0
          %903 = vmatpush2.bf16.xpose.msra.mxu0 0
          %904 = vmatprep.subr.bf16.mxu0 0
          %905 = vmatpush2.bf16.xpose.msra.mxu0 0
          %906 = vmatprep.subr.bf16.mxu0 0
          %907 = vmatpush2.bf16.xpose.msra.mxu0 0
          %908 = vmatprep.subr.bf16.mxu0 0
          %909 = vmatpush2.bf16.xpose.msra.mxu0 0
          %910 = vmatprep.subr.bf16.mxu0 0
          %911 = vmatpush2.bf16.xpose.msra.mxu0 0
          %912 = vmatprep.subr.bf16.mxu0 0
          %913 = vmatpush2.bf16.xpose.msra.mxu0 0
          %914 = vmatprep.mubr.bf16.mxu0 0
          %915 = vmatmul.mubr.bf16.gmra.mxu0 %v877
          %v916 = vpop.f32.mrf.mxu0
          %v917 = vadd.f32 0.0, %v916
          %v918 = vpop.f32.mrf.mxu0
          %v919 = vpop.f32.mrf.mxu0
          %v920 = vpop.f32.mrf.mxu0
          %921 = vdwg.mxu0
          %923 = vrot.lane.b32.xlu0 %v866, 96
          %v924 = vpop.permute.xlu0 %923
          %v926 = vsel %vm634, %v866, 0
          %v929 = vsel %vm634, %v924, 0
          %931 = vmatprep.subr.bf16.mxu0 0
          %932 = vmatpush1.bf16.xpose.msra.mxu0 0
          %933 = vmatprep.subr.bf16.mxu0 0
          %934 = vmatpush1.bf16.xpose.msra.mxu0 0
          %935 = vmatprep.subr.bf16.mxu0 0
          %936 = vmatpush1.bf16.xpose.msra.mxu0 0
          %937 = vmatprep.subr.bf16.mxu0 0
          %938 = vmatpush1.bf16.xpose.msra.mxu0 0
          %939 = vmatprep.subr.bf16.mxu0 0
          %940 = vmatpush1.bf16.xpose.msra.mxu0 0
          %941 = vmatprep.subr.bf16.mxu0 0
          %942 = vmatpush1.bf16.xpose.msra.mxu0 0
          %943 = vmatprep.subr.bf16.mxu0 0
          %944 = vmatpush1.bf16.xpose.msra.mxu0 0
          %945 = vmatprep.subr.bf16.mxu0 0
          %946 = vmatpush1.bf16.xpose.msra.mxu0 %v929
          %947 = vmatprep.subr.bf16.mxu0 0
          %948 = vmatpush2.bf16.xpose.msra.mxu0 0
          %949 = vmatprep.subr.bf16.mxu0 0
          %950 = vmatpush2.bf16.xpose.msra.mxu0 0
          %951 = vmatprep.subr.bf16.mxu0 0
          %952 = vmatpush2.bf16.xpose.msra.mxu0 0
          %953 = vmatprep.subr.bf16.mxu0 0
          %954 = vmatpush2.bf16.xpose.msra.mxu0 0
          %955 = vmatprep.subr.bf16.mxu0 0
          %956 = vmatpush2.bf16.xpose.msra.mxu0 0
          %957 = vmatprep.subr.bf16.mxu0 0
          %958 = vmatpush2.bf16.xpose.msra.mxu0 0
          %959 = vmatprep.subr.bf16.mxu0 0
          %960 = vmatpush2.bf16.xpose.msra.mxu0 0
          %961 = vmatprep.subr.bf16.mxu0 0
          %962 = vmatpush2.bf16.xpose.msra.mxu0 0
          %963 = vmatprep.mubr.bf16.mxu0 0
          %964 = vmatmul.mubr.bf16.gmra.mxu0 %v926
          %v965 = vpop.f32.mrf.mxu0
          %v966 = vadd.f32 0.0, %v965
          %v967 = vpop.f32.mrf.mxu0
          %v968 = vpop.f32.mrf.mxu0
          %v969 = vpop.f32.mrf.mxu0
          %970 = vdwg.mxu0
          %972 = vrot.lane.b32.xlu0 %v867, 96
          %v973 = vpop.permute.xlu0 %972
          %v975 = vsel %vm634, %v867, 0
          %v978 = vsel %vm634, %v973, 0
          %980 = vmatprep.subr.bf16.mxu0 0
          %981 = vmatpush1.bf16.xpose.msra.mxu0 0
          %982 = vmatprep.subr.bf16.mxu0 0
          %983 = vmatpush1.bf16.xpose.msra.mxu0 0
          %984 = vmatprep.subr.bf16.mxu0 0
          %985 = vmatpush1.bf16.xpose.msra.mxu0 0
          %986 = vmatprep.subr.bf16.mxu0 0
          %987 = vmatpush1.bf16.xpose.msra.mxu0 0
          %988 = vmatprep.subr.bf16.mxu0 0
          %989 = vmatpush1.bf16.xpose.msra.mxu0 0
          %990 = vmatprep.subr.bf16.mxu0 0
          %991 = vmatpush1.bf16.xpose.msra.mxu0 0
          %992 = vmatprep.subr.bf16.mxu0 0
          %993 = vmatpush1.bf16.xpose.msra.mxu0 0
          %994 = vmatprep.subr.bf16.mxu0 0
          %995 = vmatpush1.bf16.xpose.msra.mxu0 %v978
          %996 = vmatprep.subr.bf16.mxu0 0
          %997 = vmatpush2.bf16.xpose.msra.mxu0 0
          %998 = vmatprep.subr.bf16.mxu0 0
          %999 = vmatpush2.bf16.xpose.msra.mxu0 0
          %1000 = vmatprep.subr.bf16.mxu0 0
          %1001 = vmatpush2.bf16.xpose.msra.mxu0 0
          %1002 = vmatprep.subr.bf16.mxu0 0
          %1003 = vmatpush2.bf16.xpose.msra.mxu0 0
          %1004 = vmatprep.subr.bf16.mxu0 0
          %1005 = vmatpush2.bf16.xpose.msra.mxu0 0
          %1006 = vmatprep.subr.bf16.mxu0 0
          %1007 = vmatpush2.bf16.xpose.msra.mxu0 0
          %1008 = vmatprep.subr.bf16.mxu0 0
          %1009 = vmatpush2.bf16.xpose.msra.mxu0 0
          %1010 = vmatprep.subr.bf16.mxu0 0
          %1011 = vmatpush2.bf16.xpose.msra.mxu0 0
          %1012 = vmatprep.mubr.bf16.mxu0 0
          %1013 = vmatmul.mubr.bf16.gmra.mxu0 %v975
          %v1014 = vpop.f32.mrf.mxu0
          %v1015 = vadd.f32 0.0, %v1014
          %v1016 = vpop.f32.mrf.mxu0
          %v1017 = vpop.f32.mrf.mxu0
          %v1018 = vpop.f32.mrf.mxu0
          %1019 = vdwg.mxu0
          %1021 = vrot.lane.b32.xlu0 %v868, 96
          %v1022 = vpop.permute.xlu0 %1021
          %v1024 = vsel %vm634, %v868, 0
          %v1027 = vsel %vm634, %v1022, 0
          %1029 = vmatprep.subr.bf16.mxu0 0
          %1030 = vmatpush1.bf16.xpose.msra.mxu0 0
          %1031 = vmatprep.subr.bf16.mxu0 0
          %1032 = vmatpush1.bf16.xpose.msra.mxu0 0
          %1033 = vmatprep.subr.bf16.mxu0 0
          %1034 = vmatpush1.bf16.xpose.msra.mxu0 0
          %1035 = vmatprep.subr.bf16.mxu0 0
          %1036 = vmatpush1.bf16.xpose.msra.mxu0 0
          %1037 = vmatprep.subr.bf16.mxu0 0
          %1038 = vmatpush1.bf16.xpose.msra.mxu0 0
          %1039 = vmatprep.subr.bf16.mxu0 0
          %1040 = vmatpush1.bf16.xpose.msra.mxu0 0
          %1041 = vmatprep.subr.bf16.mxu0 0
          %1042 = vmatpush1.bf16.xpose.msra.mxu0 0
          %1043 = vmatprep.subr.bf16.mxu0 0
          %1044 = vmatpush1.bf16.xpose.msra.mxu0 %v1027
          %1045 = vmatprep.subr.bf16.mxu0 0
          %1046 = vmatpush2.bf16.xpose.msra.mxu0 0
          %1047 = vmatprep.subr.bf16.mxu0 0
          %1048 = vmatpush2.bf16.xpose.msra.mxu0 0
          %1049 = vmatprep.subr.bf16.mxu0 0
          %1050 = vmatpush2.bf16.xpose.msra.mxu0 0
          %1051 = vmatprep.subr.bf16.mxu0 0
          %1052 = vmatpush2.bf16.xpose.msra.mxu0 0
          %1053 = vmatprep.subr.bf16.mxu0 0
          %1054 = vmatpush2.bf16.xpose.msra.mxu0 0
          %1055 = vmatprep.subr.bf16.mxu0 0
          %1056 = vmatpush2.bf16.xpose.msra.mxu0 0
          %1057 = vmatprep.subr.bf16.mxu0 0
          %1058 = vmatpush2.bf16.xpose.msra.mxu0 0
          %1059 = vmatprep.subr.bf16.mxu0 0
          %1060 = vmatpush2.bf16.xpose.msra.mxu0 0
          %1061 = vmatprep.mubr.bf16.mxu0 0
          %1062 = vmatmul.mubr.bf16.gmra.mxu0 %v1024
          %v1063 = vpop.f32.mrf.mxu0
          %v1064 = vadd.f32 0.0, %v1063
          %v1065 = vpop.f32.mrf.mxu0
          %v1066 = vpop.f32.mrf.mxu0
          %v1067 = vpop.f32.mrf.mxu0
          %1068 = vdwg.mxu0
          %1070 = vrot.lane.b32.xlu0 %v869, 96
          %v1071 = vpop.permute.xlu0 %1070
          %v1073 = vsel %vm634, %v869, 0
          %v1076 = vsel %vm634, %v1071, 0
          %1078 = vmatprep.subr.bf16.mxu0 0
          %1079 = vmatpush1.bf16.xpose.msra.mxu0 0
          %1080 = vmatprep.subr.bf16.mxu0 0
          %1081 = vmatpush1.bf16.xpose.msra.mxu0 0
          %1082 = vmatprep.subr.bf16.mxu0 0
          %1083 = vmatpush1.bf16.xpose.msra.mxu0 0
          %1084 = vmatprep.subr.bf16.mxu0 0
          %1085 = vmatpush1.bf16.xpose.msra.mxu0 0
          %1086 = vmatprep.subr.bf16.mxu0 0
          %1087 = vmatpush1.bf16.xpose.msra.mxu0 0
          %1088 = vmatprep.subr.bf16.mxu0 0
          %1089 = vmatpush1.bf16.xpose.msra.mxu0 0
          %1090 = vmatprep.subr.bf16.mxu0 0
          %1091 = vmatpush1.bf16.xpose.msra.mxu0 0
          %1092 = vmatprep.subr.bf16.mxu0 0
          %1093 = vmatpush1.bf16.xpose.msra.mxu0 %v1076
          %1094 = vmatprep.subr.bf16.mxu0 0
          %1095 = vmatpush2.bf16.xpose.msra.mxu0 0
          %1096 = vmatprep.subr.bf16.mxu0 0
          %1097 = vmatpush2.bf16.xpose.msra.mxu0 0
          %1098 = vmatprep.subr.bf16.mxu0 0
          %1099 = vmatpush2.bf16.xpose.msra.mxu0 0
          %1100 = vmatprep.subr.bf16.mxu0 0
          %1101 = vmatpush2.bf16.xpose.msra.mxu0 0
          %1102 = vmatprep.subr.bf16.mxu0 0
          %1103 = vmatpush2.bf16.xpose.msra.mxu0 0
          %1104 = vmatprep.subr.bf16.mxu0 0
          %1105 = vmatpush2.bf16.xpose.msra.mxu0 0
          %1106 = vmatprep.subr.bf16.mxu0 0
          %1107 = vmatpush2.bf16.xpose.msra.mxu0 0
          %1108 = vmatprep.subr.bf16.mxu0 0
          %1109 = vmatpush2.bf16.xpose.msra.mxu0 0
          %1110 = vmatprep.mubr.bf16.mxu0 0
          %1111 = vmatmul.mubr.bf16.gmra.mxu0 %v1073
          %v1112 = vpop.f32.mrf.mxu0
          %v1113 = vadd.f32 0.0, %v1112
          %v1114 = vpop.f32.mrf.mxu0
          %v1115 = vpop.f32.mrf.mxu0
          %v1116 = vpop.f32.mrf.mxu0
          %1117 = vdwg.mxu0
          %1119 = vrot.lane.b32.xlu0 %v870, 96
          %v1120 = vpop.permute.xlu0 %1119
          %v1122 = vsel %vm634, %v870, 0
          %v1125 = vsel %vm634, %v1120, 0
          %1127 = vmatprep.subr.bf16.mxu0 0
          %1128 = vmatpush1.bf16.xpose.msra.mxu0 0
          %1129 = vmatprep.subr.bf16.mxu0 0
          %1130 = vmatpush1.bf16.xpose.msra.mxu0 0
          %1131 = vmatprep.subr.bf16.mxu0 0
          %1132 = vmatpush1.bf16.xpose.msra.mxu0 0
          %1133 = vmatprep.subr.bf16.mxu0 0
          %1134 = vmatpush1.bf16.xpose.msra.mxu0 0
          %1135 = vmatprep.subr.bf16.mxu0 0
          %1136 = vmatpush1.bf16.xpose.msra.mxu0 0
          %1137 = vmatprep.subr.bf16.mxu0 0
          %1138 = vmatpush1.bf16.xpose.msra.mxu0 0
          %1139 = vmatprep.subr.bf16.mxu0 0
          %1140 = vmatpush1.bf16.xpose.msra.mxu0 0
          %1141 = vmatprep.subr.bf16.mxu0 0
          %1142 = vmatpush1.bf16.xpose.msra.mxu0 %v1125
          %1143 = vmatprep.subr.bf16.mxu0 0
          %1144 = vmatpush2.bf16.xpose.msra.mxu0 0
          %1145 = vmatprep.subr.bf16.mxu0 0
          %1146 = vmatpush2.bf16.xpose.msra.mxu0 0
          %1147 = vmatprep.subr.bf16.mxu0 0
          %1148 = vmatpush2.bf16.xpose.msra.mxu0 0
          %1149 = vmatprep.subr.bf16.mxu0 0
          %1150 = vmatpush2.bf16.xpose.msra.mxu0 0
          %1151 = vmatprep.subr.bf16.mxu0 0
          %1152 = vmatpush2.bf16.xpose.msra.mxu0 0
          %1153 = vmatprep.subr.bf16.mxu0 0
          %1154 = vmatpush2.bf16.xpose.msra.mxu0 0
          %1155 = vmatprep.subr.bf16.mxu0 0
          %1156 = vmatpush2.bf16.xpose.msra.mxu0 0
          %1157 = vmatprep.subr.bf16.mxu0 0
          %1158 = vmatpush2.bf16.xpose.msra.mxu0 0
          %1159 = vmatprep.mubr.bf16.mxu0 0
          %1160 = vmatmul.mubr.bf16.gmra.mxu0 %v1122
          %v1161 = vpop.f32.mrf.mxu0
          %v1162 = vadd.f32 0.0, %v1161
          %v1163 = vpop.f32.mrf.mxu0
          %v1164 = vpop.f32.mrf.mxu0
          %v1165 = vpop.f32.mrf.mxu0
          %1166 = vdwg.mxu0
          %1168 = vrot.lane.b32.xlu0 %v871, 96
          %v1169 = vpop.permute.xlu0 %1168
          %v1171 = vsel %vm634, %v871, 0
          %v1174 = vsel %vm634, %v1169, 0
          %1176 = vmatprep.subr.bf16.mxu0 0
          %1177 = vmatpush1.bf16.xpose.msra.mxu0 0
          %1178 = vmatprep.subr.bf16.mxu0 0
          %1179 = vmatpush1.bf16.xpose.msra.mxu0 0
          %1180 = vmatprep.subr.bf16.mxu0 0
          %1181 = vmatpush1.bf16.xpose.msra.mxu0 0
          %1182 = vmatprep.subr.bf16.mxu0 0
          %1183 = vmatpush1.bf16.xpose.msra.mxu0 0
          %1184 = vmatprep.subr.bf16.mxu0 0
          %1185 = vmatpush1.bf16.xpose.msra.mxu0 0
          %1186 = vmatprep.subr.bf16.mxu0 0
          %1187 = vmatpush1.bf16.xpose.msra.mxu0 0
          %1188 = vmatprep.subr.bf16.mxu0 0
          %1189 = vmatpush1.bf16.xpose.msra.mxu0 0
          %1190 = vmatprep.subr.bf16.mxu0 0
          %1191 = vmatpush1.bf16.xpose.msra.mxu0 %v1174
          %1192 = vmatprep.subr.bf16.mxu0 0
          %1193 = vmatpush2.bf16.xpose.msra.mxu0 0
          %1194 = vmatprep.subr.bf16.mxu0 0
          %1195 = vmatpush2.bf16.xpose.msra.mxu0 0
          %1196 = vmatprep.subr.bf16.mxu0 0
          %1197 = vmatpush2.bf16.xpose.msra.mxu0 0
          %1198 = vmatprep.subr.bf16.mxu0 0
          %1199 = vmatpush2.bf16.xpose.msra.mxu0 0
          %1200 = vmatprep.subr.bf16.mxu0 0
          %1201 = vmatpush2.bf16.xpose.msra.mxu0 0
          %1202 = vmatprep.subr.bf16.mxu0 0
          %1203 = vmatpush2.bf16.xpose.msra.mxu0 0
          %1204 = vmatprep.subr.bf16.mxu0 0
          %1205 = vmatpush2.bf16.xpose.msra.mxu0 0
          %1206 = vmatprep.subr.bf16.mxu0 0
          %1207 = vmatpush2.bf16.xpose.msra.mxu0 0
          %1208 = vmatprep.mubr.bf16.mxu0 0
          %1209 = vmatmul.mubr.bf16.gmra.mxu0 %v1171
          %v1210 = vpop.f32.mrf.mxu0
          %v1211 = vadd.f32 0.0, %v1210
          %v1212 = vpop.f32.mrf.mxu0
          %v1213 = vpop.f32.mrf.mxu0
          %v1214 = vpop.f32.mrf.mxu0
          %1215 = vdwg.mxu0
          %1217 = vrot.lane.b32.xlu0 %v872, 96
          %v1218 = vpop.permute.xlu0 %1217
          %v1220 = vsel %vm634, %v872, 0
          %v1223 = vsel %vm634, %v1218, 0
          %1225 = vmatprep.subr.bf16.mxu0 0
          %1226 = vmatpush1.bf16.xpose.msra.mxu0 0
          %1227 = vmatprep.subr.bf16.mxu0 0
          %1228 = vmatpush1.bf16.xpose.msra.mxu0 0
          %1229 = vmatprep.subr.bf16.mxu0 0
          %1230 = vmatpush1.bf16.xpose.msra.mxu0 0
          %1231 = vmatprep.subr.bf16.mxu0 0
          %1232 = vmatpush1.bf16.xpose.msra.mxu0 0
          %1233 = vmatprep.subr.bf16.mxu0 0
          %1234 = vmatpush1.bf16.xpose.msra.mxu0 0
          %1235 = vmatprep.subr.bf16.mxu0 0
          %1236 = vmatpush1.bf16.xpose.msra.mxu0 0
          %1237 = vmatprep.subr.bf16.mxu0 0
          %1238 = vmatpush1.bf16.xpose.msra.mxu0 0
          %1239 = vmatprep.subr.bf16.mxu0 0
          %1240 = vmatpush1.bf16.xpose.msra.mxu0 %v1223
          %1241 = vmatprep.subr.bf16.mxu0 0
          %1242 = vmatpush2.bf16.xpose.msra.mxu0 0
          %1243 = vmatprep.subr.bf16.mxu0 0
          %1244 = vmatpush2.bf16.xpose.msra.mxu0 0
          %1245 = vmatprep.subr.bf16.mxu0 0
          %1246 = vmatpush2.bf16.xpose.msra.mxu0 0
          %1247 = vmatprep.subr.bf16.mxu0 0
          %1248 = vmatpush2.bf16.xpose.msra.mxu0 0
          %1249 = vmatprep.subr.bf16.mxu0 0
          %1250 = vmatpush2.bf16.xpose.msra.mxu0 0
          %1251 = vmatprep.subr.bf16.mxu0 0
          %1252 = vmatpush2.bf16.xpose.msra.mxu0 0
          %1253 = vmatprep.subr.bf16.mxu0 0
          %1254 = vmatpush2.bf16.xpose.msra.mxu0 0
          %1255 = vmatprep.subr.bf16.mxu0 0
          %1256 = vmatpush2.bf16.xpose.msra.mxu0 0
          %1257 = vmatprep.mubr.bf16.mxu0 0
          %1258 = vmatmul.mubr.bf16.gmra.mxu0 %v1220
          %v1259 = vpop.f32.mrf.mxu0
          %v1260 = vadd.f32 0.0, %v1259
          %v1261 = vpop.f32.mrf.mxu0
          %v1262 = vpop.f32.mrf.mxu0
          %v1263 = vpop.f32.mrf.mxu0
          %1264 = vdwg.mxu0
          %vm1265 = vcmask 64512
          %v1266 = vsel %vm1265, %v917, -inf
          %1267 = vmax.xlane.f32.xlu0 %v1266
          %v1268 = vpop.xlane.xlu0 %1267
          %v1269 = vsel %vm1265, %v966, -inf
          %1270 = vmax.xlane.f32.xlu0 %v1269
          %v1271 = vpop.xlane.xlu0 %1270
          %v1272 = vsel %vm1265, %v1015, -inf
          %1273 = vmax.xlane.f32.xlu0 %v1272
          %v1274 = vpop.xlane.xlu0 %1273
          %v1275 = vsel %vm1265, %v1064, -inf
          %1276 = vmax.xlane.f32.xlu0 %v1275
          %v1277 = vpop.xlane.xlu0 %1276
          %v1278 = vsel %vm1265, %v1113, -inf
          %1279 = vmax.xlane.f32.xlu0 %v1278
          %v1280 = vpop.xlane.xlu0 %1279
          %v1281 = vsel %vm1265, %v1162, -inf
          %1282 = vmax.xlane.f32.xlu0 %v1281
          %v1283 = vpop.xlane.xlu0 %1282
          %v1284 = vsel %vm1265, %v1211, -inf
          %1285 = vmax.xlane.f32.xlu0 %v1284
          %v1286 = vpop.xlane.xlu0 %1285
          %v1287 = vsel %vm1265, %v1260, -inf
          %1288 = vmax.xlane.f32.xlu0 %v1287
          %v1289 = vpop.xlane.xlu0 %1288
          %v1290 = vsub.f32 %v917, %v1268
          %v1291 = vsub.f32 %v966, %v1271
          %v1292 = vsub.f32 %v1015, %v1274
          %v1293 = vsub.f32 %v1064, %v1277
          %v1294 = vsub.f32 %v1113, %v1280
          %v1295 = vsub.f32 %v1162, %v1283
          %v1296 = vsub.f32 %v1211, %v1286
          %v1297 = vsub.f32 %v1260, %v1289
          %v1298 = vmul.f32 %v1290, 1.442695
          %v1299 = vpow.pop %v1298
          %v1300 = vmul.f32 %v1291, 1.442695
          %v1301 = vpow.pop %v1300
          %v1302 = vmul.f32 %v1292, 1.442695
          %v1303 = vpow.pop %v1302
          %v1304 = vmul.f32 %v1293, 1.442695
          %v1305 = vpow.pop %v1304
          %v1306 = vmul.f32 %v1294, 1.442695
          %v1307 = vpow.pop %v1306
          %v1308 = vmul.f32 %v1295, 1.442695
          %v1309 = vpow.pop %v1308
          %v1310 = vmul.f32 %v1296, 1.442695
          %v1311 = vpow.pop %v1310
          %v1312 = vmul.f32 %v1297, 1.442695
          %v1313 = vpow.pop %v1312
          %v1314 = vsel %vm1265, %v1299, 0.0
          %1315 = vadd.xlane.f32.xlu0 %v1314
          %v1316 = vpop.xlane.xlu0 %1315
          %v1317 = vsel %vm1265, %v1301, 0.0
          %1318 = vadd.xlane.f32.xlu0 %v1317
          %v1319 = vpop.xlane.xlu0 %1318
          %v1320 = vsel %vm1265, %v1303, 0.0
          %1321 = vadd.xlane.f32.xlu0 %v1320
          %v1322 = vpop.xlane.xlu0 %1321
          %v1323 = vsel %vm1265, %v1305, 0.0
          %1324 = vadd.xlane.f32.xlu0 %v1323
          %v1325 = vpop.xlane.xlu0 %1324
          %v1326 = vsel %vm1265, %v1307, 0.0
          %1327 = vadd.xlane.f32.xlu0 %v1326
          %v1328 = vpop.xlane.xlu0 %1327
          %v1329 = vsel %vm1265, %v1309, 0.0
          %1330 = vadd.xlane.f32.xlu0 %v1329
          %v1331 = vpop.xlane.xlu0 %1330
          %v1332 = vsel %vm1265, %v1311, 0.0
          %1333 = vadd.xlane.f32.xlu0 %v1332
          %v1334 = vpop.xlane.xlu0 %1333
          %v1335 = vsel %vm1265, %v1313, 0.0
          %1336 = vadd.xlane.f32.xlu0 %v1335
          %v1337 = vpop.xlane.xlu0 %1336
          %v1338 = vrcp.pop %v1316
          %v1339 = vrcp.pop %v1319
          %v1340 = vrcp.pop %v1322
          %v1341 = vrcp.pop %v1325
          %v1342 = vrcp.pop %v1328
          %v1343 = vrcp.pop %v1331
          %v1344 = vrcp.pop %v1334
          %v1345 = vrcp.pop %v1337
          %v1346 = vmul.f32 %v1299, %v1338
          %v1347 = vmul.f32 %v1301, %v1339
          %v1348 = vmul.f32 %v1303, %v1340
          %v1349 = vmul.f32 %v1305, %v1341
          %v1350 = vmul.f32 %v1307, %v1342
          %v1351 = vmul.f32 %v1309, %v1343
          %v1352 = vmul.f32 %v1311, %v1344
          %v1353 = vmul.f32 %v1313, %v1345
          %v1354 = vsel %vm1265, %v1346, 0.0
          %v1355 = vrot.slane %v1354, 4
          %v1356 = vadd.f32 %v1354, %v1355
          %v1357 = vrot.slane %v1356, 2
          %v1358 = vadd.f32 %v1356, %v1357
          %v1359 = vrot.slane %v1358, 1
          %v1360 = vadd.f32 %v1358, %v1359
          %v1361 = vsel %vm1265, %v1347, 0.0
          %v1362 = vrot.slane %v1361, 4
          %v1363 = vadd.f32 %v1361, %v1362
          %v1364 = vrot.slane %v1363, 2
          %v1365 = vadd.f32 %v1363, %v1364
          %v1366 = vrot.slane %v1365, 1
          %v1367 = vadd.f32 %v1365, %v1366
          %v1368 = vsel %vm1265, %v1348, 0.0
          %v1369 = vrot.slane %v1368, 4
          %v1370 = vadd.f32 %v1368, %v1369
          %v1371 = vrot.slane %v1370, 2
          %v1372 = vadd.f32 %v1370, %v1371
          %v1373 = vrot.slane %v1372, 1
          %v1374 = vadd.f32 %v1372, %v1373
          %v1375 = vsel %vm1265, %v1349, 0.0
          %v1376 = vrot.slane %v1375, 4
          %v1377 = vadd.f32 %v1375, %v1376
          %v1378 = vrot.slane %v1377, 2
          %v1379 = vadd.f32 %v1377, %v1378
          %v1380 = vrot.slane %v1379, 1
          %v1381 = vadd.f32 %v1379, %v1380
          %v1382 = vsel %vm1265, %v1350, 0.0
          %v1383 = vrot.slane %v1382, 4
          %v1384 = vadd.f32 %v1382, %v1383
          %v1385 = vrot.slane %v1384, 2
          %v1386 = vadd.f32 %v1384, %v1385
          %v1387 = vrot.slane %v1386, 1
          %v1388 = vadd.f32 %v1386, %v1387
          %v1389 = vsel %vm1265, %v1351, 0.0
          %v1390 = vrot.slane %v1389, 4
          %v1391 = vadd.f32 %v1389, %v1390
          %v1392 = vrot.slane %v1391, 2
          %v1393 = vadd.f32 %v1391, %v1392
          %v1394 = vrot.slane %v1393, 1
          %v1395 = vadd.f32 %v1393, %v1394
          %v1396 = vsel %vm1265, %v1352, 0.0
          %v1397 = vrot.slane %v1396, 4
          %v1398 = vadd.f32 %v1396, %v1397
          %v1399 = vrot.slane %v1398, 2
          %v1400 = vadd.f32 %v1398, %v1399
          %v1401 = vrot.slane %v1400, 1
          %v1402 = vadd.f32 %v1400, %v1401
          %v1403 = vsel %vm1265, %v1353, 0.0
          %v1404 = vrot.slane %v1403, 4
          %v1405 = vadd.f32 %v1403, %v1404
          %v1406 = vrot.slane %v1405, 2
          %v1407 = vadd.f32 %v1405, %v1406
          %v1408 = vrot.slane %v1407, 1
          %v1409 = vadd.f32 %v1407, %v1408
          %v1410 = vmul.f32 %v1360, %v691
          %v1411 = vmul.f32 %v1367, %v691
          %v1412 = vmul.f32 %v1374, %v691
          %v1413 = vmul.f32 %v1381, %v691
          %v1414 = vmul.f32 %v1388, %v691
          %v1415 = vmul.f32 %v1395, %v691
          %v1416 = vmul.f32 %v1402, %v691
          %v1417 = vmul.f32 %v1409, %v691
          %1419 = vbcast.lane.b32.xlu0 %v1410, 256
          %v1420 = vpop.permute.xlu0 %1419
          %1422 = vbcast.lane.b32.xlu0 %v1411, 256
          %v1423 = vpop.permute.xlu0 %1422
          %1425 = vbcast.lane.b32.xlu0 %v1412, 256
          %v1426 = vpop.permute.xlu0 %1425
          %1428 = vbcast.lane.b32.xlu0 %v1413, 256
          %v1429 = vpop.permute.xlu0 %1428
          %1431 = vbcast.lane.b32.xlu0 %v1414, 256
          %v1432 = vpop.permute.xlu0 %1431
          %1434 = vbcast.lane.b32.xlu0 %v1415, 256
          %v1435 = vpop.permute.xlu0 %1434
          %1437 = vbcast.lane.b32.xlu0 %v1416, 256
          %v1438 = vpop.permute.xlu0 %1437
          %1440 = vbcast.lane.b32.xlu0 %v1417, 256
          %v1441 = vpop.permute.xlu0 %1440
          %v1442 = vmul.f32 %v1420, %v835
          %v1443 = vmul.f32 %v1423, %v838
          %v1444 = vmul.f32 %v1426, %v843
          %v1445 = vmul.f32 %v1429, %v846
          %v1446 = vmul.f32 %v1432, %v851
          %v1447 = vmul.f32 %v1435, %v854
          %v1448 = vmul.f32 %v1438, %v859
          %v1449 = vmul.f32 %v1441, %v862
          %vm1450 = vcmask 785920
          %v1451 = vsel %vm1450, %v1442, 0.0
          %v1452 = vrot.slane %v1451, 4
          %v1453 = vadd.f32 %v1451, %v1452
          %v1454 = vrot.slane %v1453, 2
          %v1455 = vadd.f32 %v1453, %v1454
          %v1456 = vrot.slane %v1455, 1
          %v1457 = vadd.f32 %v1455, %v1456
          %v1458 = vsel %vm1450, %v1443, 0.0
          %v1459 = vrot.slane %v1458, 4
          %v1460 = vadd.f32 %v1458, %v1459
          %v1461 = vrot.slane %v1460, 2
          %v1462 = vadd.f32 %v1460, %v1461
          %v1463 = vrot.slane %v1462, 1
          %v1464 = vadd.f32 %v1462, %v1463
          %v1465 = vsel %vm1450, %v1444, 0.0
          %v1466 = vrot.slane %v1465, 4
          %v1467 = vadd.f32 %v1465, %v1466
          %v1468 = vrot.slane %v1467, 2
          %v1469 = vadd.f32 %v1467, %v1468
          %v1470 = vrot.slane %v1469, 1
          %v1471 = vadd.f32 %v1469, %v1470
          %v1472 = vsel %vm1450, %v1445, 0.0
          %v1473 = vrot.slane %v1472, 4
          %v1474 = vadd.f32 %v1472, %v1473
          %v1475 = vrot.slane %v1474, 2
          %v1476 = vadd.f32 %v1474, %v1475
          %v1477 = vrot.slane %v1476, 1
          %v1478 = vadd.f32 %v1476, %v1477
          %v1479 = vsel %vm1450, %v1446, 0.0
          %v1480 = vrot.slane %v1479, 4
          %v1481 = vadd.f32 %v1479, %v1480
          %v1482 = vrot.slane %v1481, 2
          %v1483 = vadd.f32 %v1481, %v1482
          %v1484 = vrot.slane %v1483, 1
          %v1485 = vadd.f32 %v1483, %v1484
          %v1486 = vsel %vm1450, %v1447, 0.0
          %v1487 = vrot.slane %v1486, 4
          %v1488 = vadd.f32 %v1486, %v1487
          %v1489 = vrot.slane %v1488, 2
          %v1490 = vadd.f32 %v1488, %v1489
          %v1491 = vrot.slane %v1490, 1
          %v1492 = vadd.f32 %v1490, %v1491
          %v1493 = vsel %vm1450, %v1448, 0.0
          %v1494 = vrot.slane %v1493, 4
          %v1495 = vadd.f32 %v1493, %v1494
          %v1496 = vrot.slane %v1495, 2
          %v1497 = vadd.f32 %v1495, %v1496
          %v1498 = vrot.slane %v1497, 1
          %v1499 = vadd.f32 %v1497, %v1498
          %v1500 = vsel %vm1450, %v1449, 0.0
          %v1501 = vrot.slane %v1500, 4
          %v1502 = vadd.f32 %v1500, %v1501
          %v1503 = vrot.slane %v1502, 2
          %v1504 = vadd.f32 %v1502, %v1503
          %v1505 = vrot.slane %v1504, 1
          %v1506 = vadd.f32 %v1504, %v1505
          %v1507 = vld [vmem:[#allocation3] sm:$0xff]
          %v1509 = vrot.slane %v1507, 1
          %v1510 = vrot.slane %v1507, 2
          %v1511 = vrot.slane %v1507, 3
          %v1512 = vrot.slane %v1507, 4
          %v1513 = vrot.slane %v1507, 5
          %v1514 = vrot.slane %v1507, 6
          %v1515 = vrot.slane %v1507, 7
          %1516 = vrot.lane.b32.xlu0 %v1507, 64
          %v1517 = vpop.permute.xlu0 %1516
          %1518 = vrot.lane.b32.xlu0 %v1509, 64
          %v1519 = vpop.permute.xlu0 %1518
          %1520 = vrot.lane.b32.xlu0 %v1510, 64
          %v1521 = vpop.permute.xlu0 %1520
          %1522 = vrot.lane.b32.xlu0 %v1511, 64
          %v1523 = vpop.permute.xlu0 %1522
          %1524 = vrot.lane.b32.xlu0 %v1512, 64
          %v1525 = vpop.permute.xlu0 %1524
          %1526 = vrot.lane.b32.xlu0 %v1513, 64
          %v1527 = vpop.permute.xlu0 %1526
          %1528 = vrot.lane.b32.xlu0 %v1514, 64
          %v1529 = vpop.permute.xlu0 %1528
          %1530 = vrot.lane.b32.xlu0 %v1515, 64
          %v1531 = vpop.permute.xlu0 %1530
          %v1540 = vadd.f32 %v1457, %v1517
          %v1541 = vadd.f32 %v1464, %v1519
          %v1542 = vadd.f32 %v1471, %v1521
          %v1543 = vadd.f32 %v1478, %v1523
          %v1544 = vadd.f32 %v1485, %v1525
          %v1545 = vadd.f32 %v1492, %v1527
          %v1546 = vadd.f32 %v1499, %v1529
          %v1547 = vadd.f32 %v1506, %v1531
          %v1548 = vpack.c.bf16 %v1540, %v1540
          %v1549 = vpack.c.bf16 %v1541, %v1541
          %v1550 = vpack.c.bf16 %v1542, %v1542
          %v1551 = vpack.c.bf16 %v1543, %v1543
          %v1552 = vpack.c.bf16 %v1544, %v1544
          %v1553 = vpack.c.bf16 %v1545, %v1545
          %v1554 = vpack.c.bf16 %v1546, %v1546
          %v1555 = vpack.c.bf16 %v1547, %v1547
          %v1556 = vld [vmem:[#allocation11] sm:$0xff]
          %v1557 = vld [vmem:[#allocation11 + $0x8] sm:$0xff]
          %v1558 = vld [vmem:[#allocation11 + $0x10] sm:$0xff]
          %v1559 = vld [vmem:[#allocation11 + $0x18] sm:$0xff]
          %v1560 = vld [vmem:[%s5] sm:$0x3]
          %v1562 = vlaneseq
          %v1563 = vshrl.u32 %v1562, 7
          %v1564 = vsub.s32 0, %v1563
          %v1565 = vrot.slane %v1560, %v1564
          %v1566 = vlaneseq
          %v1567 = vshrl.u32 %v1566, 7
          %v1568 = vsub.s32 1, %v1567
          %v1569 = vrot.slane %v1560, %v1568
          %v1580 = vunpack.c.l.b16 %v1548
          %v1581 = vunpack.c.l.b16 %v1549
          %v1582 = vunpack.c.l.b16 %v1550
          %v1583 = vunpack.c.l.b16 %v1551
          %v1584 = vunpack.c.l.b16 %v1552
          %v1585 = vunpack.c.l.b16 %v1553
          %v1586 = vunpack.c.l.b16 %v1554
          %v1587 = vunpack.c.l.b16 %v1555
          %v1588 = vrot.slane %v1581, 7
          %v1589 = vsel %vm716, %v1588, %v1580
          %v1590 = vrot.slane %v1582, 6
          %v1591 = vsel %vm718, %v1590, %v1589
          %v1592 = vrot.slane %v1583, 5
          %v1593 = vsel %vm720, %v1592, %v1591
          %v1594 = vrot.slane %v1584, 4
          %v1595 = vsel %vm722, %v1594, %v1593
          %v1596 = vrot.slane %v1585, 3
          %v1597 = vsel %vm724, %v1596, %v1595
          %v1598 = vrot.slane %v1586, 2
          %v1599 = vsel %vm726, %v1598, %v1597
          %v1600 = vrot.slane %v1587, 1
          %v1601 = vsel %vm728, %v1600, %v1599
          %v1602 = vpack.c.b16 %v1601, %v1601
          %1603 = vrot.lane.b32.xlu0 %v1602, 64
          %v1604 = vpop.permute.xlu0 %1603
          %v1609 = vunpack.c.l.b16 %v1556
          %v1610 = vunpack.c.h.b16 %v1556
          %v1611 = vunpack.c.l.b16 %v1557
          %v1612 = vunpack.c.h.b16 %v1557
          %v1613 = vunpack.c.l.b16 %v1558
          %v1614 = vunpack.c.h.b16 %v1558
          %v1615 = vunpack.c.l.b16 %v1559
          %v1616 = vunpack.c.h.b16 %v1559
          %v1617 = vpack.c.b16 %v1611, %v1609
          %v1618 = vpack.c.b16 %v1612, %v1610
          %v1619 = vpack.c.b16 %v1615, %v1613
          %v1620 = vpack.c.b16 %v1616, %v1614
          %v1626 = vsel %vm634, %v1604, 0
          %1628 = vmatprep.subr.bf16.mxu0 0
          %1629 = vmatpush1.bf16.msra.mxu0 0
          %1630 = vmatprep.subr.bf16.mxu0 0
          %1631 = vmatpush1.bf16.msra.mxu0 0
          %1632 = vmatprep.subr.bf16.mxu0 0
          %1633 = vmatpush1.bf16.msra.mxu0 0
          %1634 = vmatprep.subr.bf16.mxu0 0
          %1635 = vmatpush1.bf16.msra.mxu0 0
          %1636 = vmatprep.subr.bf16.mxu0 0
          %1637 = vmatpush1.bf16.msra.mxu0 0
          %1638 = vmatprep.subr.bf16.mxu0 0
          %1639 = vmatpush1.bf16.msra.mxu0 0
          %1640 = vmatprep.subr.bf16.mxu0 %v1620
          %1641 = vmatpush1.bf16.msra.mxu0 %v1619
          %1642 = vmatprep.subr.bf16.mxu0 %v1618
          %1643 = vmatpush1.bf16.msra.mxu0 %v1617
          %1644 = vmatprep.subr.bf16.mxu0 0
          %1645 = vmatpush2.bf16.msra.mxu0 0
          %1646 = vmatprep.subr.bf16.mxu0 0
          %1647 = vmatpush2.bf16.msra.mxu0 0
          %1648 = vmatprep.subr.bf16.mxu0 0
          %1649 = vmatpush2.bf16.msra.mxu0 0
          %1650 = vmatprep.subr.bf16.mxu0 0
          %1651 = vmatpush2.bf16.msra.mxu0 0
          %1652 = vmatprep.subr.bf16.mxu0 0
          %1653 = vmatpush2.bf16.msra.mxu0 0
          %1654 = vmatprep.subr.bf16.mxu0 0
          %1655 = vmatpush2.bf16.msra.mxu0 0
          %1656 = vmatprep.subr.bf16.mxu0 0
          %1657 = vmatpush2.bf16.msra.mxu0 0
          %1658 = vmatprep.subr.bf16.mxu0 0
          %1659 = vmatpush2.bf16.msra.mxu0 0
          %1660 = vmatprep.mubr.bf16.mxu0 0
          %1661 = vmatmul.mubr.bf16.gmra.mxu0 %v1626
          %v1662 = vpop.f32.mrf.mxu0
          %v1663 = vadd.f32 %v1565, %v1662
          %v1664 = vpop.f32.mrf.mxu0
          %v1665 = vadd.f32 %v1569, %v1664
          %v1666 = vpop.f32.mrf.mxu0
          %v1667 = vpop.f32.mrf.mxu0
          %1668 = vdwg.mxu0
          %v1669 = vld [vmem:[%s6] sm:$0x3]
          %v1670 = vld [vmem:[%s7] sm:$0x3]
          %v1671 = vadd.f32 %v1663, %v1665
          %1672 = vadd.xlane.f32.xlu0 %v1671
          %v1673 = vpop.xlane.xlu0 %1672
          %v1674 = vrcp.pop 256.0
          %v1675 = vmul.f32 %v1673, %v1674
          %v1676 = vsub.f32 %v1663, %v1675
          %v1677 = vsub.f32 %v1665, %v1675
          %v1678 = vmul.f32 %v1676, %v1676
          %v1679 = vmul.f32 %v1677, %v1677
          %v1680 = vadd.f32 %v1678, %v1679
          %1681 = vadd.xlane.f32.xlu0 %v1680
          %v1682 = vpop.xlane.xlu0 %1681
          %v1683 = vmul.f32 %v1682, %v1674
          %v1684 = vadd.f32 %v1683, 1e-05
          %v1685 = vrsqrt.pop %v1684
          %v1686 = vmul.f32 %v1676, %v1685
          %v1687 = vmul.f32 %v1677, %v1685
          %v1689 = vlaneseq
          %v1690 = vshrl.u32 %v1689, 7
          %v1691 = vsub.s32 0, %v1690
          %v1692 = vrot.slane %v1669, %v1691
          %v1693 = vlaneseq
          %v1694 = vshrl.u32 %v1693, 7
          %v1695 = vsub.s32 1, %v1694
          %v1696 = vrot.slane %v1669, %v1695
          %v1699 = vmul.f32 %v1686, %v1692
          %v1700 = vmul.f32 %v1687, %v1696
          %v1702 = vlaneseq
          %v1703 = vshrl.u32 %v1702, 7
          %v1704 = vsub.s32 0, %v1703
          %v1705 = vrot.slane %v1670, %v1704
          %v1706 = vlaneseq
          %v1707 = vshrl.u32 %v1706, 7
          %v1708 = vsub.s32 1, %v1707
          %v1709 = vrot.slane %v1670, %v1708
          %v1712 = vadd.f32 %v1699, %v1705
          %v1713 = vadd.f32 %v1700, %v1709
          %v1714 = vmul.f32 %v1712, 0.5
          %v1715 = vmul.f32 %v1713, 0.5
          %v1716 = vrcp.pop 1.4142135
          %v1717 = vmul.f32 %v1712, %v1716
          %v1718 = vmul.f32 %v1713, %v1716
          %v1719 = verf.f32.pop %v1717
          %v1720 = verf.f32.pop %v1718
          %v1721 = vadd.f32 %v1719, 1.0
          %v1722 = vadd.f32 %v1720, 1.0
          %v1723 = vmul.f32 %v1714, %v1721
          %v1724 = vmul.f32 %v1715, %v1722
          %v1725 = vpack.c.bf16 %v1723, %v1723
          %v1726 = vpack.c.bf16 %v1724, %v1724
          %v1727 = vld [vmem:[#allocation12] sm:$0xf]
          %v1728 = vld [vmem:[#allocation12 + $0x4] sm:$0xf]
          %v1729 = vld [vmem:[#allocation12 + $0x8] sm:$0xf]
          %v1730 = vld [vmem:[#allocation12 + $0xc] sm:$0xf]
          %v1731 = vld [vmem:[#allocation12 + $0x10] sm:$0xf]
          %v1732 = vld [vmem:[#allocation12 + $0x14] sm:$0xf]
          %v1733 = vld [vmem:[#allocation12 + $0x18] sm:$0xf]
          %v1734 = vld [vmem:[#allocation12 + $0x1c] sm:$0xf]
          %v1735 = vld [vmem:[#allocation12 + $0x20] sm:$0xf]
          %v1736 = vld [vmem:[#allocation12 + $0x24] sm:$0xf]
          %v1737 = vld [vmem:[#allocation12 + $0x28] sm:$0xf]
          %v1738 = vld [vmem:[#allocation12 + $0x2c] sm:$0xf]
          %v1739 = vld [vmem:[#allocation12 + $0x30] sm:$0xf]
          %v1740 = vld [vmem:[#allocation12 + $0x34] sm:$0xf]
          %v1741 = vld [vmem:[#allocation12 + $0x38] sm:$0xf]
          %v1742 = vld [vmem:[#allocation12 + $0x3c] sm:$0xf]
          %v1743 = vld [vmem:[#allocation12 + $0x40] sm:$0xf]
          %v1744 = vld [vmem:[#allocation12 + $0x44] sm:$0xf]
          %v1745 = vld [vmem:[#allocation12 + $0x48] sm:$0xf]
          %v1746 = vld [vmem:[#allocation12 + $0x4c] sm:$0xf]
          %v1747 = vld [vmem:[#allocation12 + $0x50] sm:$0xf]
          %v1748 = vld [vmem:[#allocation12 + $0x54] sm:$0xf]
          %v1749 = vld [vmem:[#allocation12 + $0x58] sm:$0xf]
          %v1750 = vld [vmem:[#allocation12 + $0x5c] sm:$0xf]
          %v1751 = vld [vmem:[#allocation12 + $0x60] sm:$0xf]
          %v1752 = vld [vmem:[#allocation12 + $0x64] sm:$0xf]
          %v1753 = vld [vmem:[#allocation12 + $0x68] sm:$0xf]
          %v1754 = vld [vmem:[#allocation12 + $0x6c] sm:$0xf]
          %v1755 = vld [vmem:[#allocation12 + $0x70] sm:$0xf]
          %v1756 = vld [vmem:[#allocation12 + $0x74] sm:$0xf]
          %v1757 = vld [vmem:[#allocation12 + $0x78] sm:$0xf]
          %v1758 = vld [vmem:[#allocation12 + $0x7c] sm:$0xf]
          %v1759 = vld [vmem:[%s9] sm:$0x1]
          %v1761 = vlaneseq
          %v1762 = vshrl.u32 %v1761, 7
          %v1763 = vsub.s32 0, %v1762
          %v1764 = vrot.slane %v1759, %v1763
          %v1798 = vunpack.c.l.b16 %v1727
          %v1799 = vunpack.c.l.b16 %v1728
          %v1800 = vunpack.c.l.b16 %v1729
          %v1801 = vunpack.c.l.b16 %v1730
          %v1802 = vunpack.c.l.b16 %v1731
          %v1803 = vunpack.c.l.b16 %v1732
          %v1804 = vunpack.c.l.b16 %v1733
          %v1805 = vunpack.c.l.b16 %v1734
          %v1806 = vunpack.c.l.b16 %v1735
          %v1807 = vunpack.c.l.b16 %v1736
          %v1808 = vunpack.c.l.b16 %v1737
          %v1809 = vunpack.c.l.b16 %v1738
          %v1810 = vunpack.c.l.b16 %v1739
          %v1811 = vunpack.c.l.b16 %v1740
          %v1812 = vunpack.c.l.b16 %v1741
          %v1813 = vunpack.c.l.b16 %v1742
          %v1814 = vunpack.c.l.b16 %v1743
          %v1815 = vunpack.c.l.b16 %v1744
          %v1816 = vunpack.c.l.b16 %v1745
          %v1817 = vunpack.c.l.b16 %v1746
          %v1818 = vunpack.c.l.b16 %v1747
          %v1819 = vunpack.c.l.b16 %v1748
          %v1820 = vunpack.c.l.b16 %v1749
          %v1821 = vunpack.c.l.b16 %v1750
          %v1822 = vunpack.c.l.b16 %v1751
          %v1823 = vunpack.c.l.b16 %v1752
          %v1824 = vunpack.c.l.b16 %v1753
          %v1825 = vunpack.c.l.b16 %v1754
          %v1826 = vunpack.c.l.b16 %v1755
          %v1827 = vunpack.c.l.b16 %v1756
          %v1828 = vunpack.c.l.b16 %v1757
          %v1829 = vunpack.c.l.b16 %v1758
          %v1830 = vpack.c.b16 %v1799, %v1798
          %v1831 = vpack.c.b16 %v1801, %v1800
          %v1832 = vpack.c.b16 %v1803, %v1802
          %v1833 = vpack.c.b16 %v1805, %v1804
          %v1834 = vpack.c.b16 %v1807, %v1806
          %v1835 = vpack.c.b16 %v1809, %v1808
          %v1836 = vpack.c.b16 %v1811, %v1810
          %v1837 = vpack.c.b16 %v1813, %v1812
          %v1838 = vpack.c.b16 %v1815, %v1814
          %v1839 = vpack.c.b16 %v1817, %v1816
          %v1840 = vpack.c.b16 %v1819, %v1818
          %v1841 = vpack.c.b16 %v1821, %v1820
          %v1842 = vpack.c.b16 %v1823, %v1822
          %v1843 = vpack.c.b16 %v1825, %v1824
          %v1844 = vpack.c.b16 %v1827, %v1826
          %v1845 = vpack.c.b16 %v1829, %v1828
          %1862 = vmatprep.subr.bf16.mxu0 0
          %1863 = vmatpush1.bf16.msra.mxu0 %v1837
          %1864 = vmatprep.subr.bf16.mxu0 0
          %1865 = vmatpush1.bf16.msra.mxu0 %v1836
          %1866 = vmatprep.subr.bf16.mxu0 0
          %1867 = vmatpush1.bf16.msra.mxu0 %v1835
          %1868 = vmatprep.subr.bf16.mxu0 0
          %1869 = vmatpush1.bf16.msra.mxu0 %v1834
          %1870 = vmatprep.subr.bf16.mxu0 0
          %1871 = vmatpush1.bf16.msra.mxu0 %v1833
          %1872 = vmatprep.subr.bf16.mxu0 0
          %1873 = vmatpush1.bf16.msra.mxu0 %v1832
          %1874 = vmatprep.subr.bf16.mxu0 0
          %1875 = vmatpush1.bf16.msra.mxu0 %v1831
          %1876 = vmatprep.subr.bf16.mxu0 0
          %1877 = vmatpush1.bf16.msra.mxu0 %v1830
          %1878 = vmatprep.subr.bf16.mxu0 0
          %1879 = vmatpush2.bf16.msra.mxu0 %v1845
          %1880 = vmatprep.subr.bf16.mxu0 0
          %1881 = vmatpush2.bf16.msra.mxu0 %v1844
          %1882 = vmatprep.subr.bf16.mxu0 0
          %1883 = vmatpush2.bf16.msra.mxu0 %v1843
          %1884 = vmatprep.subr.bf16.mxu0 0
          %1885 = vmatpush2.bf16.msra.mxu0 %v1842
          %1886 = vmatprep.subr.bf16.mxu0 0
          %1887 = vmatpush2.bf16.msra.mxu0 %v1841
          %1888 = vmatprep.subr.bf16.mxu0 0
          %1889 = vmatpush2.bf16.msra.mxu0 %v1840
          %1890 = vmatprep.subr.bf16.mxu0 0
          %1891 = vmatpush2.bf16.msra.mxu0 %v1839
          %1892 = vmatprep.subr.bf16.mxu0 0
          %1893 = vmatpush2.bf16.msra.mxu0 %v1838
          %1894 = vmatprep.mubr.bf16.mxu0 %v1726
          %1895 = vmatmul.mubr.bf16.gmra.mxu0 %v1725
          %v1896 = vpop.f32.mrf.mxu0
          %v1897 = vadd.f32 %v1764, %v1896
          %v1898 = vpop.f32.mrf.mxu0
          %v1899 = vpop.f32.mrf.mxu0
          %v1900 = vpop.f32.mrf.mxu0
          %1901 = vdwg.mxu0
          %v1902 = vld [vmem:[%s10] sm:$0x1]
          %v1903 = vld [vmem:[%s11] sm:$0x1]
          %1904 = vadd.xlane.f32.xlu0 %v1897
          %v1905 = vpop.xlane.xlu0 %1904
          %v1906 = vrcp.pop 128.0
          %v1907 = vmul.f32 %v1905, %v1906
          %v1908 = vsub.f32 %v1897, %v1907
          %v1909 = vmul.f32 %v1908, %v1908
          %1910 = vadd.xlane.f32.xlu0 %v1909
          %v1911 = vpop.xlane.xlu0 %1910
          %v1912 = vmul.f32 %v1911, %v1906
          %v1913 = vadd.f32 %v1912, 1e-05
          %v1914 = vrsqrt.pop %v1913
          %v1915 = vmul.f32 %v1908, %v1914
          %v1917 = vlaneseq
          %v1918 = vshrl.u32 %v1917, 7
          %v1919 = vsub.s32 0, %v1918
          %v1920 = vrot.slane %v1902, %v1919
          %v1922 = vmul.f32 %v1915, %v1920
          %v1924 = vlaneseq
          %v1925 = vshrl.u32 %v1924, 7
          %v1926 = vsub.s32 0, %v1925
          %v1927 = vrot.slane %v1903, %v1926
          %v1929 = vadd.f32 %v1922, %v1927
          %v1930 = vmul.f32 %v1929, 0.5
          %v1931 = vmul.f32 %v1929, %v1716
          %v1932 = verf.f32.pop %v1931
          %v1933 = vadd.f32 %v1932, 1.0
          %v1934 = vmul.f32 %v1930, %v1933
          %v1935 = vpack.c.bf16 %v1934, %v1934
          %v1936 = vld [vmem:[#allocation14] sm:$0xf]
          %v1937 = vld [vmem:[#allocation14 + $0x4] sm:$0xf]
          %v1938 = vld [vmem:[#allocation14 + $0x8] sm:$0xf]
          %v1939 = vld [vmem:[#allocation14 + $0xc] sm:$0xf]
          %v1940 = vld [vmem:[#allocation14 + $0x10] sm:$0xf]
          %v1941 = vld [vmem:[#allocation14 + $0x14] sm:$0xf]
          %v1942 = vld [vmem:[#allocation14 + $0x18] sm:$0xf]
          %v1943 = vld [vmem:[#allocation14 + $0x1c] sm:$0xf]
          %v1944 = vld [vmem:[#allocation14 + $0x20] sm:$0xf]
          %v1945 = vld [vmem:[#allocation14 + $0x24] sm:$0xf]
          %v1946 = vld [vmem:[#allocation14 + $0x28] sm:$0xf]
          %v1947 = vld [vmem:[#allocation14 + $0x2c] sm:$0xf]
          %v1948 = vld [vmem:[#allocation14 + $0x30] sm:$0xf]
          %v1949 = vld [vmem:[#allocation14 + $0x34] sm:$0xf]
          %v1950 = vld [vmem:[#allocation14 + $0x38] sm:$0xf]
          %v1951 = vld [vmem:[#allocation14 + $0x3c] sm:$0xf]
          %v1952 = vld [vmem:[%s13] sm:$0x1]
          %v1954 = vlaneseq
          %v1955 = vshrl.u32 %v1954, 7
          %v1956 = vsub.s32 0, %v1955
          %v1957 = vrot.slane %v1952, %v1956
          %v1975 = vunpack.c.l.b16 %v1936
          %v1976 = vunpack.c.l.b16 %v1937
          %v1977 = vunpack.c.l.b16 %v1938
          %v1978 = vunpack.c.l.b16 %v1939
          %v1979 = vunpack.c.l.b16 %v1940
          %v1980 = vunpack.c.l.b16 %v1941
          %v1981 = vunpack.c.l.b16 %v1942
          %v1982 = vunpack.c.l.b16 %v1943
          %v1983 = vunpack.c.l.b16 %v1944
          %v1984 = vunpack.c.l.b16 %v1945
          %v1985 = vunpack.c.l.b16 %v1946
          %v1986 = vunpack.c.l.b16 %v1947
          %v1987 = vunpack.c.l.b16 %v1948
          %v1988 = vunpack.c.l.b16 %v1949
          %v1989 = vunpack.c.l.b16 %v1950
          %v1990 = vunpack.c.l.b16 %v1951
          %v1991 = vpack.c.b16 %v1976, %v1975
          %v1992 = vpack.c.b16 %v1978, %v1977
          %v1993 = vpack.c.b16 %v1980, %v1979
          %v1994 = vpack.c.b16 %v1982, %v1981
          %v1995 = vpack.c.b16 %v1984, %v1983
          %v1996 = vpack.c.b16 %v1986, %v1985
          %v1997 = vpack.c.b16 %v1988, %v1987
          %v1998 = vpack.c.b16 %v1990, %v1989
          %2007 = vmatprep.subr.bf16.mxu0 0
          %2008 = vmatpush1.bf16.msra.mxu0 %v1998
          %2009 = vmatprep.subr.bf16.mxu0 0
          %2010 = vmatpush1.bf16.msra.mxu0 %v1997
          %2011 = vmatprep.subr.bf16.mxu0 0
          %2012 = vmatpush1.bf16.msra.mxu0 %v1996
          %2013 = vmatprep.subr.bf16.mxu0 0
          %2014 = vmatpush1.bf16.msra.mxu0 %v1995
          %2015 = vmatprep.subr.bf16.mxu0 0
          %2016 = vmatpush1.bf16.msra.mxu0 %v1994
          %2017 = vmatprep.subr.bf16.mxu0 0
          %2018 = vmatpush1.bf16.msra.mxu0 %v1993
          %2019 = vmatprep.subr.bf16.mxu0 0
          %2020 = vmatpush1.bf16.msra.mxu0 %v1992
          %2021 = vmatprep.subr.bf16.mxu0 0
          %2022 = vmatpush1.bf16.msra.mxu0 %v1991
          %2023 = vmatprep.subr.bf16.mxu0 0
          %2024 = vmatpush2.bf16.msra.mxu0 0
          %2025 = vmatprep.subr.bf16.mxu0 0
          %2026 = vmatpush2.bf16.msra.mxu0 0
          %2027 = vmatprep.subr.bf16.mxu0 0
          %2028 = vmatpush2.bf16.msra.mxu0 0
          %2029 = vmatprep.subr.bf16.mxu0 0
          %2030 = vmatpush2.bf16.msra.mxu0 0
          %2031 = vmatprep.subr.bf16.mxu0 0
          %2032 = vmatpush2.bf16.msra.mxu0 0
          %2033 = vmatprep.subr.bf16.mxu0 0
          %2034 = vmatpush2.bf16.msra.mxu0 0
          %2035 = vmatprep.subr.bf16.mxu0 0
          %2036 = vmatpush2.bf16.msra.mxu0 0
          %2037 = vmatprep.subr.bf16.mxu0 0
          %2038 = vmatpush2.bf16.msra.mxu0 0
          %2039 = vmatprep.mubr.bf16.mxu0 0
          %2040 = vmatmul.mubr.bf16.gmra.mxu0 %v1935
          %v2041 = vpop.f32.mrf.mxu0
          %v2042 = vadd.f32 %v1957, %v2041
          %v2043 = vpop.f32.mrf.mxu0
          %v2044 = vpop.f32.mrf.mxu0
          %v2045 = vpop.f32.mrf.mxu0
          %2046 = vdwg.mxu0
          %2047 = vst [vmem:[#allocation15] sm:$0xff] %v2042
        $region108: #{tpu_custom_call.1} parent=75 // pred_fallthru
          _
        // Predicated region
        $region109: #{tpu_custom_call.1} parent=75 // pred_check
          %p2048 = pneg %p363
        $region110: #{tpu_custom_call.1} parent=75 // pred_check_branch
          %2050 = sbr.rel (%p2048) target = $region112
        $region111: #{tpu_custom_call.1} parent=75 // pred_region
          %s2052 = ssub.s32 128, 128
          %2053 = vsyncadd [#allocation6], %s2052
          %s2054 = smul.addr %s36, 128
          %s2055 = scalar_lea.hbm %s14, %s2054
          %s2057 = sshll.u32 [#allocation15], 4
          %s2058 = int_to_ptr.vmem [resolvable:$true] %s2057
          %2060 = dma.vmem_to_hbm [thread:$0]  %s2058, 128, %s2055, [#allocation6]
        $region112: #{tpu_custom_call.1} parent=75 // pred_fallthru
          _
        // Predicated region
        $region113: #{tpu_custom_call.1} parent=75 // pred_check
          %p2061 = pneg %p363
        $region114: #{tpu_custom_call.1} parent=75 // pred_check_branch
          %2063 = sbr.rel (%p2061) target = $region116
        $region115: #{tpu_custom_call.1} parent=75 // pred_region
          %2064 = dma.done [#allocation6], 128
        $region116: #{tpu_custom_call.1} parent=75 // pred_fallthru
          _
      $region76: #{tpu_custom_call.1} parent=5 // pred_fallthru
        _
      %p2065 = scmp.le.s32.totalorder 2, %s27
      // Predicated region
      $region117: #{tpu_custom_call.1} parent=5 // pred_check
        %p2066 = pneg %p2065
      $region118: #{tpu_custom_call.1} parent=5 // pred_check_branch
        %2068 = sbr.rel (%p2066) target = $region120
      $region119: #{tpu_custom_call.1} parent=5 // pred_region
        %s2069 = ssub.s32 %s27, 2
      $region120: #{tpu_custom_call.1} parent=5 // pred_fallthru
        _
    $region6: #{tpu_custom_call.1} parent=1 // loop_footer
      %s31 = sadd.s32 1, %s27
    $region7: #{tpu_custom_call.1} parent=1 // loop_footer_branch
      %26 = sbr.rel target = $region3
    $region8: #{tpu_custom_call.1} parent=1 // loop_exit
      _
    %2070 = vsyncpa [#allocation5], 1
    %s2071 = scalar_lea.sflag [#allocation5], 1
    %2072 = vsyncpa %s2071, 1
    %2073 = vsyncpa [#allocation10], 1
    %2074 = vsyncpa [#allocation13], 1
    %2075 = vsyncpa [#allocation6], 1
    %s2076 = scalar_lea.sflag [#allocation6], 1
    %2077 = vsyncpa %s2076, 1
    %2078 = vsyncpa [#allocation7], 1
    %s2079 = scalar_lea.sflag [#allocation7], 1
    %2080 = vsyncpa %s2079, 1

</llo_original>
